<compile_context>
chip_gen: v7x
topology: tpu7x:2x2x1
jax: 0.10.0
libtpu: 0.0.40
codegen_flags: <defaults>
</compile_context>

<pallas_src>
import functools
import math

import numpy as np
import jax
import jax.numpy as jnp
from jax import lax
from jax.experimental import pallas as pl
from jax.experimental.pallas import tpu as pltpu


def _round_up(x: int, m: int) -> int:
    return ((x + m - 1) // m) * m


# ---------------------------------------------------------------------------
# Host-side constant operators (deterministic functions of H, T, theta).
# ---------------------------------------------------------------------------
def _ramp_filter_matrix(size: int) -> np.ndarray:
    """Dense (size, size) matrix equivalent to the FFT Ram-Lak ramp filter
    applied along the detector axis with zero padding to
    max(64, 2^ceil(log2(2*size))) (skimage / pytorch_radon convention)."""
    # TODO(synk): exact RampFilter source was not supplied with the module; this
    # is the standard skimage-style Ram-Lak frequency response as a matrix.
    p = max(64, int(2 ** math.ceil(math.log2(2 * size))))
    n = np.concatenate((np.arange(1, p // 2 + 1, 2), np.arange(p // 2 - 1, 0, -2)))
    f = np.zeros(p, dtype=np.float64)
    f[0] = 0.25
    f[1::2] = -1.0 / (np.pi * n) ** 2
    fourier_filter = 2.0 * np.real(np.fft.fft(f))                      # (p,)
    eye_pad = np.zeros((p, size), dtype=np.float64)
    eye_pad[:size, :size] = np.eye(size)
    m = np.real(np.fft.ifft(fourier_filter[:, None] * np.fft.fft(eye_pad, axis=0),
                            axis=0))
    return m[:size, :].astype(np.float32)                              # (size, size)


def _angle_interp_matrix(t: int) -> np.ndarray:
    """(t, t) matrix A with A[s, i] = weight of source angle s for output angle
    i, reproducing grid_sample (bilinear, zeros padding, align_corners=False)
    along the angle axis where the module builds grid-x as i*2/(t-1) - 1
    (faithful to the PyTorch forward as written)."""
    a = np.zeros((t, t), dtype=np.float32)
    denom = max(t - 1, 1)
    for i in range(t):
        gx = i * 2.0 / denom - 1.0
        ix = ((gx + 1.0) * t - 1.0) / 2.0        # align_corners=False unnormalize
        x0 = int(np.floor(ix))
        wx = ix - x0
        if 0 <= x0 < t:
            a[x0, i] += 1.0 - wx
        if 0 <= x0 + 1 < t:
            a[x0 + 1, i] += wx
    return a


# ---------------------------------------------------------------------------
# Pallas kernel: backprojection (+ circle mask + pi/(2T) scaling).
# ---------------------------------------------------------------------------
def _backproject_kernel(ug_ref, a_ref, b_ref, c_ref, p_ref, o_ref,
                        *, n_theta, chunk):
    # ug_ref : (2, PIX_BLK)   VMEM f32   row0 = xgrid (flat), row1 = ygrid (flat)
    # a_ref  : (KH, 1)        VMEM f32   per-row coef multiplying xgrid
    # b_ref  : (KH, 1)        VMEM f32   per-row coef multiplying ygrid
    # c_ref  : (KH, 1)        VMEM f32   per-row constant (d - center)
    # p_ref  : (NB, KH)       VMEM bf16  filtered projections, col = a*Hp + d
    # o_ref  : (NB, PIX_BLK)  VMEM f32   resident output block / accumulator
    kb = pl.program_id(2)

    @pl.when(kb == 0)
    def _init():
        o_ref[...] = jnp.zeros_like(o_ref)

    a_col = a_ref[...]                       # (KH, 1)
    b_col = b_ref[...]
    c_col = c_ref[...]
    p_blk = p_ref[...]                       # (NB, KH) bf16

    pix = o_ref.shape[1]
    # Lane-chunked build + dot-accumulate: each chunk's hat slab is a value
    # (no scratch store/reload) and its MXU pushes can overlap the next
    # chunk's VPU hat build (separate VLIW slots).
    for p0 in range(0, pix, chunk):
        uw = ug_ref[0:1, p0:p0 + chunk]      # (1, chunk)
        uh = ug_ref[1:2, p0:p0 + chunk]      # (1, chunk)
        # Bilinear "hat": max(0, 1 - |d - iy|) with iy folded into A, B, C.
        w = jnp.maximum(1.0 - jnp.abs(uw * a_col + uh * b_col + c_col), 0.0)
        o_ref[:, p0:p0 + chunk] = o_ref[:, p0:p0 + chunk] + jnp.dot(
            p_blk, w.astype(p_blk.dtype), preferred_element_type=jnp.float32)

    @pl.when(kb == pl.num_programs(2) - 1)
    def _finalize():
        uw = ug_ref[0:1, :]
        uh = ug_ref[1:2, :]
        circle = (uw * uw + uh * uh) <= 1.0
        scale = math.pi / (2.0 * n_theta)
        o_ref[...] = jnp.where(circle, o_ref[...] * scale, 0.0)


# ---------------------------------------------------------------------------
# Wrapper.
# ---------------------------------------------------------------------------
def iradon_fbp(x, theta_deg):
    """x: (B, C, D, T) float32 sinogram (NCHW).  Returns (B, C, D, D) float32.
    Matches IRadon(theta=theta_deg, circle=True, use_filter=RampFilter())."""
    b, c, h, t = map(int, x.shape)
    theta_deg = np.asarray(theta_deg, dtype=np.float64)
    assert theta_deg.shape[0] == t

    # ---- host-side constants -------------------------------------------------
    m_filt = _ramp_filter_matrix(h)                           # (H, H)
    a_interp = _angle_interp_matrix(t)                        # (T, T)
    rad = np.deg2rad(theta_deg)

    # Batch slabs: fill the MXU M dimension (256-wide on v6e/v7x, >=128 on
    # v5e); pad N to a multiple of 16 for bf16 sublane packing.
    n = b * c
    nb = min(256, _round_up(n, 16))
    n_pad = _round_up(n, nb)

    # Detector padding (zeros) + angle block so the contraction depth KH is a
    # 128 multiple and ~512 deep.
    h_pad = _round_up(h, 16)
    k_blk = math.lcm(h_pad, 128) // h_pad
    while k_blk * h_pad < 512 and k_blk < t:
        k_blk *= 2
    kh = k_blk * h_pad
    t_pad = _round_up(t, k_blk)

    # Pixel (lane) blocking: lane-dense, always 128-aligned (never a raw hh
    # fallback), capped so live VMEM stays v7x-safe at nb=256, and split so a
    # second TensorCore gets work when the batch axis has a single block.
    hh = h * h
    hh128 = _round_up(hh, 128)
    pix_cap = 8192
    pix_blk = min(hh128, pix_cap)
    if (n_pad // nb) == 1 and pl.cdiv(hh128, pix_blk) == 1 and pix_blk >= 256:
        pix_blk = _round_up(pix_blk // 2, 128)
    hh_pad = _round_up(hh128, pix_blk)
    chunk = next(cc for cc in (512, 384, 256, 128) if pix_blk % cc == 0)

    # Per-row hat coefficients:  W[a*Hp + d, p] = max(0, 1 - |uw*A + uh*B + C|)
    # where iy = (uw*cos - uh*sin)*H/2 + (H-1)/2  and  A = -cos*H/2,
    # B = sin*H/2, C = d - (H-1)/2.  Padded angles get cos=sin=0 and padded
    # detector rows multiply zero projections, so both are harmless.
    half_h = 0.5 * h
    center = 0.5 * (h - 1)
    cosv = np.zeros(t_pad, dtype=np.float64); cosv[:t] = np.cos(rad)
    sinv = np.zeros(t_pad, dtype=np.float64); sinv[:t] = np.sin(rad)
    d_idx = np.arange(h_pad, dtype=np.float64)
    a_rows = np.repeat(-cosv * half_h, h_pad).astype(np.float32).reshape(-1, 1)
    b_rows = np.repeat(sinv * half_h, h_pad).astype(np.float32).reshape(-1, 1)
    c_rows = np.tile(d_idx - center, t_pad).astype(np.float32).reshape(-1, 1)

    # Unit image grid, flattened row-major (pixel p = row*h + col).  Padded
    # pixels get coordinates outside the unit circle so they are masked to 0.
    u = np.linspace(-1.0, 1.0, h)
    ug = np.full((2, hh_pad), 2.0, dtype=np.float32)
    ug[0, :hh] = np.tile(u, h)                                # xgrid (col idx)
    ug[1, :hh] = np.repeat(u, h)                              # ygrid (row idx)

    # ---- batched filtering (ramp + angle resampling), plain XLA --------------
    xt = jnp.transpose(x, (0, 1, 3, 2)).reshape(n, t, h)      # (N, T, D)
    hi = lax.Precision.HIGHEST
    xf = jnp.einsum("ntj,ij->nti", xt, jnp.asarray(m_filt), precision=hi)
    proj = jnp.einsum("nti,ts->nsi", xf, jnp.asarray(a_interp), precision=hi)
    proj = jnp.pad(proj, ((0, n_pad - n), (0, t_pad - t), (0, h_pad - h)))
    p_flat = proj.reshape(n_pad, t_pad * h_pad).astype(jnp.bfloat16)

    grid = (n_pad // nb, hh_pad // pix_blk, t_pad // k_blk)
    kernel = functools.partial(_backproject_kernel, n_theta=t, chunk=chunk)

    flops = 2 * n_pad * (t_pad * h_pad) * hh_pad              # backproj matmuls
    bytes_accessed = int(p_flat.size * 2 * (hh_pad // pix_blk)
                         + n_pad * hh_pad * 4
                         + (2 * hh_pad + 3 * t_pad * h_pad) * 4 * (n_pad // nb))

    out = pl.pallas_call(
        kernel,
        out_shape=jax.ShapeDtypeStruct((n_pad, hh_pad), jnp.float32),
        grid=grid,
        in_specs=[
            pl.BlockSpec((2, pix_blk), lambda i, j, kb: (0, j)),     # unit grid
            pl.BlockSpec((kh, 1), lambda i, j, kb: (kb, 0)),         # coef A
            pl.BlockSpec((kh, 1), lambda i, j, kb: (kb, 0)),         # coef B
            pl.BlockSpec((kh, 1), lambda i, j, kb: (kb, 0)),         # coef C
            pl.BlockSpec((nb, kh), lambda i, j, kb: (i, kb)),        # projections
        ],
        out_specs=pl.BlockSpec((nb, pix_blk), lambda i, j, kb: (i, j)),
        compiler_params=pltpu.CompilerParams(
            dimension_semantics=("parallel", "parallel", "arbitrary"),
            vmem_limit_bytes=48 * 1024 * 1024),
        cost_estimate=pl.CostEstimate(flops=flops, transcendentals=0,
                                      bytes_accessed=bytes_accessed),
    )(jnp.asarray(ug), jnp.asarray(a_rows), jnp.asarray(b_rows),
      jnp.asarray(c_rows), p_flat)

    return out[:n, :hh].reshape(b, c, h, h)


# ---------------------------------------------------------------------------
# Pure numpy reference (same semantics) for a sanity check.
# ---------------------------------------------------------------------------
def iradon_reference(x, theta_deg):
    x = np.asarray(x, dtype=np.float64)
    b, c, h, t = x.shape
    m = _ramp_filter_matrix(h).astype(np.float64)
    a = _angle_interp_matrix(t).astype(np.float64)
    xf = np.einsum("ij,bcjt->bcit", m, x)
    proj = np.einsum("bcdt,ts->bcds", xf, a)
    u = np.linspace(-1.0, 1.0, h)
    rad = np.deg2rad(np.asarray(theta_deg, dtype=np.float64))
    reco = np.zeros((b, c, h, h))
    for i in range(t):
        ycoord = u[None, :] * np.cos(rad[i]) - u[:, None] * np.sin(rad[i])
        iy = ((ycoord + 1.0) * h - 1.0) / 2.0
        y0 = np.floor(iy).astype(np.int64)
        wy = iy - y0
        y1 = y0 + 1
        p = proj[:, :, :, i]
        v0 = np.where((y0 >= 0) & (y0 < h),
                      np.take(p, np.clip(y0, 0, h - 1), axis=2), 0.0)
        v1 = np.where((y1 >= 0) & (y1 < h),
                      np.take(p, np.clip(y1, 0, h - 1), axis=2), 0.0)
        reco += v0 * (1.0 - wy) + v1 * wy
    circle = (u[None, :] ** 2 + u[:, None] ** 2) <= 1.0
    return np.where(circle, reco * np.pi / (2.0 * t), 0.0)


if __name__ == "__main__":
    num_proj = 180
    theta = np.linspace(0.0, 180.0, num_proj, endpoint=False)

    key = jax.random.PRNGKey(0)
    b, c, d = 2, 4, 16                                   # small NCHW sinogram
    x = jax.random.normal(key, (b, c, d, num_proj), dtype=jnp.float32)

    out = jax.block_until_ready(iradon_fbp(x, theta))

    ref = iradon_reference(np.asarray(x), theta)
    np.testing.assert_allclose(np.asarray(out), ref, rtol=3e-2, atol=3e-3)
    assert out.shape == (b, c, d, d) and out.dtype == jnp.float32

    print("KERNEL_OK")
</pallas_src>

<mosaic_0001>
module attributes {stable_mosaic.version = 11 : i64} {
  func.func @_backproject_kernel(%arg0: i32, %arg1: i32, %arg2: i32, %arg3: memref<2x128xf32, #tpu.memory_space<vmem>>, %arg4: memref<512x1xf32, #tpu.memory_space<vmem>>, %arg5: memref<512x1xf32, #tpu.memory_space<vmem>>, %arg6: memref<512x1xf32, #tpu.memory_space<vmem>>, %arg7: memref<16x512xbf16, #tpu.memory_space<vmem>>, %arg8: memref<16x128xf32, #tpu.memory_space<vmem>>) attributes {dimension_semantics = [#tpu.dimension_semantics<parallel>, #tpu.dimension_semantics<parallel>, #tpu.dimension_semantics<arbitrary>], iteration_bounds = array<i64: 1, 2, 6>, scalar_prefetch = 0 : i64, scratch_operands = 0 : i64, tpu.core_type = #tpu.core_type<tc>, window_params = [{transform_indices = @transform_0, window_bounds = array<i64: 2, 128>}, {transform_indices = @transform_1, window_bounds = array<i64: 512, 1>}, {transform_indices = @transform_2, window_bounds = array<i64: 512, 1>}, {transform_indices = @transform_3, window_bounds = array<i64: 512, 1>}, {transform_indices = @transform_4, window_bounds = array<i64: 16, 512>}, {transform_indices = @transform_5, window_bounds = array<i64: 16, 128>}]} {
    %c0_i32 = arith.constant 0 : i32
    %0 = arith.cmpi eq, %arg2, %c0_i32 : i32
    %1 = arith.extui %0 : i1 to i32
    %c0_i32_0 = arith.constant 0 : i32
    %2 = arith.cmpi ne, %1, %c0_i32_0 : i32
    scf.if %2 {
      %cst_18 = arith.constant 0.000000e+00 : f32
      %31 = vector.broadcast %cst_18 : f32 to vector<16x128xf32>
      %c0_19 = arith.constant 0 : index
      %c0_20 = arith.constant 0 : index
      %32 = vector.load %arg8[%c0_19, %c0_20] : memref<16x128xf32, #tpu.memory_space<vmem>>, vector<16x128xf32>
      tpu.vector_store %arg8[%c0_19, %c0_20], %31 {strides = array<i32>} : memref<16x128xf32, #tpu.memory_space<vmem>>, vector<16x128xf32>,
    } else {
    }
    %c0 = arith.constant 0 : index
    %c0_1 = arith.constant 0 : index
    %3 = vector.load %arg4[%c0, %c0_1] : memref<512x1xf32, #tpu.memory_space<vmem>>, vector<512x1xf32>
    %c0_2 = arith.constant 0 : index
    %c0_3 = arith.constant 0 : index
    %4 = vector.load %arg5[%c0_2, %c0_3] : memref<512x1xf32, #tpu.memory_space<vmem>>, vector<512x1xf32>
    %c0_4 = arith.constant 0 : index
    %c0_5 = arith.constant 0 : index
    %5 = vector.load %arg6[%c0_4, %c0_5] : memref<512x1xf32, #tpu.memory_space<vmem>>, vector<512x1xf32>
    %c0_6 = arith.constant 0 : index
    %c0_7 = arith.constant 0 : index
    %6 = vector.load %arg7[%c0_6, %c0_7] : memref<16x512xbf16, #tpu.memory_space<vmem>>, vector<16x512xbf16>
    %c0_8 = arith.constant 0 : index
    %c0_9 = arith.constant 0 : index
    %7 = vector.load %arg3[%c0_8, %c0_9] : memref<2x128xf32, #tpu.memory_space<vmem>>, vector<1x128xf32>
    %c1 = arith.constant 1 : index
    %c0_10 = arith.constant 0 : index
    %8 = vector.load %arg3[%c1, %c0_10] : memref<2x128xf32, #tpu.memory_space<vmem>>, vector<1x128xf32>
    %9 = vector.broadcast %7 : vector<1x128xf32> to vector<512x128xf32>
    %10 = vector.broadcast %3 : vector<512x1xf32> to vector<512x128xf32>
    %11 = arith.mulf %9, %10 : vector<512x128xf32>
    %12 = vector.broadcast %8 : vector<1x128xf32> to vector<512x128xf32>
    %13 = vector.broadcast %4 : vector<512x1xf32> to vector<512x128xf32>
    %14 = arith.mulf %12, %13 : vector<512x128xf32>
    %15 = arith.addf %11, %14 : vector<512x128xf32>
    %16 = vector.broadcast %5 : vector<512x1xf32> to vector<512x128xf32>
    %17 = arith.addf %15, %16 : vector<512x128xf32>
    %18 = math.absf %17 : vector<512x128xf32>
    %cst = arith.constant 1.000000e+00 : f32
    %19 = vector.broadcast %cst : f32 to vector<512x128xf32>
    %20 = arith.subf %19, %18 : vector<512x128xf32>
    %cst_11 = arith.constant 0.000000e+00 : f32
    %21 = vector.broadcast %cst_11 : f32 to vector<512x128xf32>
    %22 = arith.maximumf %20, %21 : vector<512x128xf32>
    %c0_12 = arith.constant 0 : index
    %c0_13 = arith.constant 0 : index
    %23 = vector.load %arg8[%c0_12, %c0_13] : memref<16x128xf32, #tpu.memory_space<vmem>>, vector<16x128xf32>
    %24 = arith.truncf %22 : vector<512x128xf32> to vector<512x128xbf16>
    %cst_14 = arith.constant dense<0.000000e+00> : vector<16x128xf32>
    %25 = tpu.matmul %6, %24, %cst_14 {dimension_numbers = #tpu.dot_dimension_numbers<[1], [0], [0], [1], [0, 0, 1, 1], [], []>} : vector<16x512xbf16>, vector<512x128xbf16>, vector<16x128xf32> -> vector<16x128xf32>
    %26 = arith.addf %23, %25 : vector<16x128xf32>
    %c0_15 = arith.constant 0 : index
    %c0_16 = arith.constant 0 : index
    %27 = vector.load %arg8[%c0_15, %c0_16] : memref<16x128xf32, #tpu.memory_space<vmem>>, vector<16x128xf32>
    tpu.vector_store %arg8[%c0_15, %c0_16], %26 {strides = array<i32>} : memref<16x128xf32, #tpu.memory_space<vmem>>, vector<16x128xf32>,
    %c5_i32 = arith.constant 5 : i32
    %28 = arith.cmpi eq, %arg2, %c5_i32 : i32
    %29 = arith.extui %28 : i1 to i32
    %c0_i32_17 = arith.constant 0 : i32
    %30 = arith.cmpi ne, %29, %c0_i32_17 : i32
    scf.if %30 {
      %c0_18 = arith.constant 0 : index
      %c0_19 = arith.constant 0 : index
      %31 = vector.load %arg3[%c0_18, %c0_19] : memref<2x128xf32, #tpu.memory_space<vmem>>, vector<1x128xf32>
      %c1_20 = arith.constant 1 : index
      %c0_21 = arith.constant 0 : index
      %32 = vector.load %arg3[%c1_20, %c0_21] : memref<2x128xf32, #tpu.memory_space<vmem>>, vector<1x128xf32>
      %33 = arith.mulf %31, %31 : vector<1x128xf32>
      %34 = arith.mulf %32, %32 : vector<1x128xf32>
      %35 = arith.addf %33, %34 : vector<1x128xf32>
      %cst_22 = arith.constant 1.000000e+00 : f32
      %36 = vector.broadcast %cst_22 : f32 to vector<1x128xf32>
      %37 = arith.cmpf ole, %35, %36 : vector<1x128xf32>
      %c0_23 = arith.constant 0 : index
      %c0_24 = arith.constant 0 : index
      %38 = vector.load %arg8[%c0_23, %c0_24] : memref<16x128xf32, #tpu.memory_space<vmem>>, vector<16x128xf32>
      %cst_25 = arith.constant 0.00872664619 : f32
      %39 = vector.broadcast %cst_25 : f32 to vector<16x128xf32>
      %40 = arith.mulf %38, %39 : vector<16x128xf32>
      %cst_26 = arith.constant 0.000000e+00 : f32
      %41 = vector.shape_cast %37 : vector<1x128xi1> to vector<1x128xi1>
      %42 = vector.broadcast %41 : vector<1x128xi1> to vector<16x128xi1>
      %43 = vector.broadcast %cst_26 : f32 to vector<16x128xf32>
      %44 = arith.select %42, %40, %43 : vector<16x128xi1>, vector<16x128xf32>
      %c0_27 = arith.constant 0 : index
      %c0_28 = arith.constant 0 : index
      %45 = vector.load %arg8[%c0_27, %c0_28] : memref<16x128xf32, #tpu.memory_space<vmem>>, vector<16x128xf32>
      tpu.vector_store %arg8[%c0_27, %c0_28], %44 {strides = array<i32>} : memref<16x128xf32, #tpu.memory_space<vmem>>, vector<16x128xf32>,
    } else {
    }
    return
  }
  func.func @transform_0(%arg0: i32, %arg1: i32, %arg2: i32) -> (i32, i32) {
    %c0_i32 = arith.constant 0 : i32
    %c0_i32_0 = arith.constant 0 : i32
    return %c0_i32, %arg1 : i32, i32
  }
  func.func @transform_1(%arg0: i32, %arg1: i32, %arg2: i32) -> (i32, i32) {
    %c0_i32 = arith.constant 0 : i32
    %c0_i32_0 = arith.constant 0 : i32
    return %arg2, %c0_i32 : i32, i32
  }
  func.func @transform_2(%arg0: i32, %arg1: i32, %arg2: i32) -> (i32, i32) {
    %c0_i32 = arith.constant 0 : i32
    %c0_i32_0 = arith.constant 0 : i32
    return %arg2, %c0_i32 : i32, i32
  }
  func.func @transform_3(%arg0: i32, %arg1: i32, %arg2: i32) -> (i32, i32) {
    %c0_i32 = arith.constant 0 : i32
    %c0_i32_0 = arith.constant 0 : i32
    return %arg2, %c0_i32 : i32, i32
  }
  func.func @transform_4(%arg0: i32, %arg1: i32, %arg2: i32) -> (i32, i32) {
    %c0_i32 = arith.constant 0 : i32
    return %arg0, %arg2 : i32, i32
  }
  func.func @transform_5(%arg0: i32, %arg1: i32, %arg2: i32) -> (i32, i32) {
    %c0_i32 = arith.constant 0 : i32
    return %arg0, %arg1 : i32, i32
  }
}

</mosaic_0001>

<llo_original>
// kernel: tpu_custom_call.1
$region0: #{tpu_custom_call.1}
  #allocation0 [shape = 'u32[]', space=smem, size = 0x4, offset = 0x4, fixed_abs, tag = 'smem constant byte address 0x4 - core index']
  #allocation1 [shape = 'u32[144,128]{1,0:T(1,128)}', space=vmem, size = 0x12000, scoped, tag = 'internal scratch']
  %s0 = inlined_call_operand.vmem [shape: f32[2,256], index: 0, kind: input, shape index: {}]
  %s1 = inlined_call_operand.vmem [shape: f32[3072,1], index: 1, kind: input, shape index: {}]
  %s2 = inlined_call_operand.vmem [shape: f32[3072,1], index: 2, kind: input, shape index: {}]
  %s3 = inlined_call_operand.vmem [shape: f32[3072,1], index: 3, kind: input, shape index: {}]
  %s4 = inlined_call_operand.vmem [shape: bf16[16,3072], index: 4, kind: input, shape index: {}]
  %s5 = inlined_call_operand.hbm [shape: f32[16,256], index: 5, kind: output, shape index: {}]
  %s6 = sld [smem:[#allocation0]]
  $region84: #{tpu_custom_call.1} parent=0
    _
  %s8 = ssub.s32 1, %s6
  %s9 = scalar_select 0, %s8, %s6
  $region1: #{tpu_custom_call.1} parent=0
    #allocation2 [shape = 'u8[32768]{0}', space=vmem, size = 0x8000, scoped, tag = 'input window, operand 4']
    #allocation3 [shape = 'u8[16384]{0}', space=vmem, size = 0x4000, scoped, tag = 'output window, operand 0']
    #allocation4 [shape = 's32[2]{0}', space=sflag, size = 0x8, scoped, tag = 'scoped memory for tpu_custom_call.1']
    %10 = vsyncpa [#allocation4], 0
    %s11 = scalar_lea.sflag [#allocation4], 1
    %12 = vsyncpa %s11, 0
    loop: start=0, step=1, limit=14
    $region2: #{tpu_custom_call.1} parent=1 // loop_pre_header
      _
    $region3: #{tpu_custom_call.1} parent=1 // loop_header
      %s14 = sphi 0, %s18
      %p15 = scmp.ge.s32.totalorder %s14, 14
      %s21 = sphi 0, %s40
      %s22 = sphi 0, %s36
      %s23 = sphi 0, %s32
      %s24 = sphi 0, %s21
      %s25 = sphi 0, %s22
      %s26 = sphi 0, %s23
      %s27 = sphi 0, %s24
      %s28 = sphi 0, %s25
      %s29 = sphi 0, %s26
      %s43 = sphi 0, %s45
      %s46 = sphi 0, %s43
      %s47 = sphi 0, %s46
      %s63 = sphi 0, %s47
      %s69 = sphi 0, %s71
      %s72 = sphi 0, %s69
      %s73 = sphi 0, %s72
      %s89 = sphi 0, %s73
      %s95 = sphi 0, %s97
      %s98 = sphi 0, %s95
      %s99 = sphi 0, %s98
      %s115 = sphi 0, %s99
      %s121 = sphi 0, %s123
      %s124 = sphi 0, %s121
      %s125 = sphi 0, %s124
      %s141 = sphi 0, %s125
      %s149 = sphi 0, %s151
      %s152 = sphi 0, %s149
      %s153 = sphi 0, %s152
      %s169 = sphi 0, %s153
      %s177 = sphi 0, %s179
      %s180 = sphi 0, %s177
      %s181 = sphi 0, %s180
      %s197 = sphi 0, %s181
    $region4: #{tpu_custom_call.1} parent=1 // loop_header_branch
      %17 = sbr.rel (%p15) target = $region8
    $region5: #{tpu_custom_call.1} parent=1 // loop_body
      %s19 = ssub.s32 %s14, 1
      %s20 = ssub.s32 %s14, 2
      %s30 = sadd.s32 1, %s23
      %p31 = scmp.ge.s32.totalorder %s30, 6
      %s32 = scalar_select %p31, 0, %s30
      %s33 = sadd.s32 1, %s22
      %s34 = scalar_select %p31, %s33, %s22
      %p35 = scmp.ge.s32.totalorder %s34, 2
      %s36 = scalar_select %p35, 0, %s34
      %s37 = sadd.s32 1, %s21
      %s38 = scalar_select %p35, %s37, %s21
      %p39 = scmp.ge.s32.totalorder %s38, 1
      %s40 = scalar_select %p39, 0, %s38
      %s41 = ssub.s32 %s22, %s36
      %p42 = scmp.eq.s32.totalorder %s41, 0
      %s44 = sadd.s32 %s43, 1
      %s45 = scalar_select %p42, %s43, %s44
      %p48 = pneg %p42
      %p49 = scmp.eq.s32.totalorder %s14, 11
      %p50 = por %p48, %p49
      %p51 = scmp.ne.s32.totalorder %s43, %s46
      %p52 = scmp.eq.s32.totalorder %s14, 0
      %p53 = por %p51, %p52
      %p54 = scmp.ne.s32.totalorder %s43, %s46
      %p55 = scmp.eq.s32.totalorder %s19, 11
      %p56 = por %p54, %p55
      %p57 = scmp.ne.s32.totalorder %s46, %s47
      %p58 = scmp.eq.s32.totalorder %s19, 0
      %p59 = por %p57, %p58
      %p60 = scmp.ne.s32.totalorder %s46, %s47
      %p61 = scmp.eq.s32.totalorder %s20, 11
      %p62 = por %p60, %p61
      %p64 = scmp.ne.s32.totalorder %s47, %s63
      %p65 = scmp.eq.s32.totalorder %s20, 0
      %p66 = por %p64, %p65
      %s67 = ssub.s32 %s23, %s32
      %p68 = scmp.eq.s32.totalorder %s67, 0
      %s70 = sadd.s32 %s69, 1
      %s71 = scalar_select %p68, %s69, %s70
      %p74 = pneg %p68
      %p75 = scmp.eq.s32.totalorder %s14, 11
      %p76 = por %p74, %p75
      %p77 = scmp.ne.s32.totalorder %s69, %s72
      %p78 = scmp.eq.s32.totalorder %s14, 0
      %p79 = por %p77, %p78
      %p80 = scmp.ne.s32.totalorder %s69, %s72
      %p81 = scmp.eq.s32.totalorder %s19, 11
      %p82 = por %p80, %p81
      %p83 = scmp.ne.s32.totalorder %s72, %s73
      %p84 = scmp.eq.s32.totalorder %s19, 0
      %p85 = por %p83, %p84
      %p86 = scmp.ne.s32.totalorder %s72, %s73
      %p87 = scmp.eq.s32.totalorder %s20, 11
      %p88 = por %p86, %p87
      %p90 = scmp.ne.s32.totalorder %s73, %s89
      %p91 = scmp.eq.s32.totalorder %s20, 0
      %p92 = por %p90, %p91
      %s93 = ssub.s32 %s23, %s32
      %p94 = scmp.eq.s32.totalorder %s93, 0
      %s96 = sadd.s32 %s95, 1
      %s97 = scalar_select %p94, %s95, %s96
      %p100 = pneg %p94
      %p101 = scmp.eq.s32.totalorder %s14, 11
      %p102 = por %p100, %p101
      %p103 = scmp.ne.s32.totalorder %s95, %s98
      %p104 = scmp.eq.s32.totalorder %s14, 0
      %p105 = por %p103, %p104
      %p106 = scmp.ne.s32.totalorder %s95, %s98
      %p107 = scmp.eq.s32.totalorder %s19, 11
      %p108 = por %p106, %p107
      %p109 = scmp.ne.s32.totalorder %s98, %s99
      %p110 = scmp.eq.s32.totalorder %s19, 0
      %p111 = por %p109, %p110
      %p112 = scmp.ne.s32.totalorder %s98, %s99
      %p113 = scmp.eq.s32.totalorder %s20, 11
      %p114 = por %p112, %p113
      %p116 = scmp.ne.s32.totalorder %s99, %s115
      %p117 = scmp.eq.s32.totalorder %s20, 0
      %p118 = por %p116, %p117
      %s119 = ssub.s32 %s23, %s32
      %p120 = scmp.eq.s32.totalorder %s119, 0
      %s122 = sadd.s32 %s121, 1
      %s123 = scalar_select %p120, %s121, %s122
      %p126 = pneg %p120
      %p127 = scmp.eq.s32.totalorder %s14, 11
      %p128 = por %p126, %p127
      %p129 = scmp.ne.s32.totalorder %s121, %s124
      %p130 = scmp.eq.s32.totalorder %s14, 0
      %p131 = por %p129, %p130
      %p132 = scmp.ne.s32.totalorder %s121, %s124
      %p133 = scmp.eq.s32.totalorder %s19, 11
      %p134 = por %p132, %p133
      %p135 = scmp.ne.s32.totalorder %s124, %s125
      %p136 = scmp.eq.s32.totalorder %s19, 0
      %p137 = por %p135, %p136
      %p138 = scmp.ne.s32.totalorder %s124, %s125
      %p139 = scmp.eq.s32.totalorder %s20, 11
      %p140 = por %p138, %p139
      %p142 = scmp.ne.s32.totalorder %s125, %s141
      %p143 = scmp.eq.s32.totalorder %s20, 0
      %p144 = por %p142, %p143
      %s145 = ssub.s32 %s21, %s40
      %s146 = ssub.s32 %s23, %s32
      %s147 = sor.u32 %s145, %s146
      %p148 = scmp.eq.s32.totalorder %s147, 0
      %s150 = sadd.s32 %s149, 1
      %s151 = scalar_select %p148, %s149, %s150
      %p154 = pneg %p148
      %p155 = scmp.eq.s32.totalorder %s14, 11
      %p156 = por %p154, %p155
      %p157 = scmp.ne.s32.totalorder %s149, %s152
      %p158 = scmp.eq.s32.totalorder %s14, 0
      %p159 = por %p157, %p158
      %p160 = scmp.ne.s32.totalorder %s149, %s152
      %p161 = scmp.eq.s32.totalorder %s19, 11
      %p162 = por %p160, %p161
      %p163 = scmp.ne.s32.totalorder %s152, %s153
      %p164 = scmp.eq.s32.totalorder %s19, 0
      %p165 = por %p163, %p164
      %p166 = scmp.ne.s32.totalorder %s152, %s153
      %p167 = scmp.eq.s32.totalorder %s20, 11
      %p168 = por %p166, %p167
      %p170 = scmp.ne.s32.totalorder %s153, %s169
      %p171 = scmp.eq.s32.totalorder %s20, 0
      %p172 = por %p170, %p171
      %s173 = ssub.s32 %s21, %s40
      %s174 = ssub.s32 %s22, %s36
      %s175 = sor.u32 %s173, %s174
      %p176 = scmp.eq.s32.totalorder %s175, 0
      %s178 = sadd.s32 %s177, 1
      %s179 = scalar_select %p176, %s177, %s178
      %p182 = pneg %p176
      %p183 = scmp.eq.s32.totalorder %s14, 11
      %p184 = por %p182, %p183
      %p185 = scmp.ne.s32.totalorder %s177, %s180
      %p186 = scmp.eq.s32.totalorder %s14, 0
      %p187 = por %p185, %p186
      %p188 = scmp.ne.s32.totalorder %s177, %s180
      %p189 = scmp.eq.s32.totalorder %s19, 11
      %p190 = por %p188, %p189
      %p191 = scmp.ne.s32.totalorder %s180, %s181
      %p192 = scmp.eq.s32.totalorder %s19, 0
      %p193 = por %p191, %p192
      %p194 = scmp.ne.s32.totalorder %s180, %s181
      %p195 = scmp.eq.s32.totalorder %s20, 11
      %p196 = por %p194, %p195
      %p198 = scmp.ne.s32.totalorder %s181, %s197
      %p199 = scmp.eq.s32.totalorder %s20, 0
      %p200 = por %p198, %p199
      %p201 = scmp.le.s32.totalorder 1, %s14
      %p202 = scmp.lt.s32.totalorder %s14, 13
      %p203 = pnand %p201, %p202
      %p204 = pneg %p203
      // Predicated region
      $region9: #{tpu_custom_call.1} parent=5 // pred_check
        _
      $region10: #{tpu_custom_call.1} parent=5 // pred_check_branch
        %206 = sbr.rel (%p203) target = $region12
      $region11: #{tpu_custom_call.1} parent=5 // pred_region
        %s207 = ssub.s32 %s14, 1
      $region12: #{tpu_custom_call.1} parent=5 // pred_fallthru
        _
      %p208 = scmp.lt.s32.totalorder %s14, 12
      // Predicated region
      $region13: #{tpu_custom_call.1} parent=5 // pred_check
        %p209 = pneg %p208
      $region14: #{tpu_custom_call.1} parent=5 // pred_check_branch
        %211 = sbr.rel (%p209) target = $region16
      $region15: #{tpu_custom_call.1} parent=5 // pred_region
        // Predicated region
        $region17: #{tpu_custom_call.1} parent=15 // pred_check
          %p212 = pneg %p53
        $region18: #{tpu_custom_call.1} parent=15 // pred_check_branch
          %214 = sbr.rel (%p212) target = $region20
        $region19: #{tpu_custom_call.1} parent=15 // pred_region
          %p215 = scmp.lt.s32.totalorder %s22, 1
          %s216 = scalar_select %p215, %s22, 1
          %s217 = smul.addr %s216, 2
          %s218 = scalar_lea.vmem %s0, %s217
        $region20: #{tpu_custom_call.1} parent=15 // pred_fallthru
          _
        // Predicated region
        $region21: #{tpu_custom_call.1} parent=15 // pred_check
          %p219 = pneg %p79
        $region22: #{tpu_custom_call.1} parent=15 // pred_check_branch
          %221 = sbr.rel (%p219) target = $region24
        $region23: #{tpu_custom_call.1} parent=15 // pred_region
          %s222 = smul.u32 64, %s23
          %p223 = scmp.lt.s32.totalorder %s222, 383
          %s224 = scalar_select %p223, %s222, 383
          %s225 = smul.addr %s224, 8
          %s226 = scalar_lea.vmem %s1, %s225
          %s227 = smul.u32 64, %s23
        $region24: #{tpu_custom_call.1} parent=15 // pred_fallthru
          _
        // Predicated region
        $region25: #{tpu_custom_call.1} parent=15 // pred_check
          %p228 = pneg %p105
        $region26: #{tpu_custom_call.1} parent=15 // pred_check_branch
          %230 = sbr.rel (%p228) target = $region28
        $region27: #{tpu_custom_call.1} parent=15 // pred_region
          %s231 = smul.u32 64, %s23
          %p232 = scmp.lt.s32.totalorder %s231, 383
          %s233 = scalar_select %p232, %s231, 383
          %s234 = smul.addr %s233, 8
          %s235 = scalar_lea.vmem %s2, %s234
          %s236 = smul.u32 64, %s23
        $region28: #{tpu_custom_call.1} parent=15 // pred_fallthru
          _
        // Predicated region
        $region29: #{tpu_custom_call.1} parent=15 // pred_check
          %p237 = pneg %p131
        $region30: #{tpu_custom_call.1} parent=15 // pred_check_branch
          %239 = sbr.rel (%p237) target = $region32
        $region31: #{tpu_custom_call.1} parent=15 // pred_region
          %s240 = smul.u32 64, %s23
          %p241 = scmp.lt.s32.totalorder %s240, 383
          %s242 = scalar_select %p241, %s240, 383
          %s243 = smul.addr %s242, 8
          %s244 = scalar_lea.vmem %s3, %s243
          %s245 = smul.u32 64, %s23
        $region32: #{tpu_custom_call.1} parent=15 // pred_fallthru
          _
        // Predicated region
        $region33: #{tpu_custom_call.1} parent=15 // pred_check
          %p246 = pneg %p159
        $region34: #{tpu_custom_call.1} parent=15 // pred_check_branch
          %248 = sbr.rel (%p246) target = $region36
        $region35: #{tpu_custom_call.1} parent=15 // pred_region
          %s249 = sand.u32 %s149, 1
          %s250 = sand.u32 %s149, 1
          %s251 = smul.addr %s250, 32
          %s252 = scalar_lea.vmem [#allocation2], %s251
          %s253 = smul.u32 2, %s21
          %s254 = smul.u32 4, %s23
          %s255 = smul.addr %s253, 24
          %s256 = sadd.s32 %s254, %s255
          %s257 = smul.addr %s256, 4
          %s258 = scalar_lea.vmem %s4, %s257
          // Predicated region
          $region37: #{tpu_custom_call.1} parent=35 // pred_check
            _
          $region38: #{tpu_custom_call.1} parent=35 // pred_check_branch
            %260 = sbr.rel (0) target = $region40
          $region39: #{tpu_custom_call.1} parent=35 // pred_region
            // Predicated region
            $region41: #{tpu_custom_call.1} parent=39 // pred_check
              _
            $region42: #{tpu_custom_call.1} parent=39 // pred_check_branch
              %262 = sbr.rel (0) target = $region44
            $region43: #{tpu_custom_call.1} parent=39 // pred_region
              loop: start=0, step=1, limit=1
              $region45: #{tpu_custom_call.1} parent=43 // loop_pre_header
                _
              $region46: #{tpu_custom_call.1} parent=43 // loop_header
                %s264 = sphi 0, %s268
                %p265 = scmp.ge.s32.totalorder %s264, 1
                %s269 = sphi %s258, %s258
                %s270 = sphi %s252, %s252
              $region47: #{tpu_custom_call.1} parent=43 // loop_header_branch
                %267 = sbr.rel (%p265) target = $region51
              $region48: #{tpu_custom_call.1} parent=43 // loop_body
                %v271 = vld [vmem:[%s269] sm:$0xff]
                %272 = vst [vmem:[%s270] sm:$0xff] %v271
                %v273 = vld [vmem:[%s269 + $0x8] sm:$0xff]
                %274 = vst [vmem:[%s270 + $0x8] sm:$0xff] %v273
                %v275 = vld [vmem:[%s269 + $0x60] sm:$0xff]
                %276 = vst [vmem:[%s270 + $0x10] sm:$0xff] %v275
                %v277 = vld [vmem:[%s269 + $0x68] sm:$0xff]
                %278 = vst [vmem:[%s270 + $0x18] sm:$0xff] %v277
              $region49: #{tpu_custom_call.1} parent=43 // loop_footer
                %s268 = sadd.s32 1, %s264
              $region50: #{tpu_custom_call.1} parent=43 // loop_footer_branch
                %263 = sbr.rel target = $region46
              $region51: #{tpu_custom_call.1} parent=43 // loop_exit
                _
            $region44: #{tpu_custom_call.1} parent=39 // pred_fallthru
              _
            // Predicated region
            $region52: #{tpu_custom_call.1} parent=39 // pred_check
              _
            $region53: #{tpu_custom_call.1} parent=39 // pred_check_branch
              %280 = sbr.rel target = $region55
            $region54: #{tpu_custom_call.1} parent=39 // pred_region
              _
            $region55: #{tpu_custom_call.1} parent=39 // pred_fallthru
              _
          $region40: #{tpu_custom_call.1} parent=35 // pred_fallthru
            _
          %281 = vnop
        $region36: #{tpu_custom_call.1} parent=15 // pred_fallthru
          _
      $region16: #{tpu_custom_call.1} parent=5 // pred_fallthru
        _
      %p282 = scmp.le.s32.totalorder 1, %s14
      %p283 = scmp.lt.s32.totalorder %s14, 13
      %p284 = pnand %p282, %p283
      %p285 = pneg %p284
      // Predicated region
      $region56: #{tpu_custom_call.1} parent=5 // pred_check
        _
      $region57: #{tpu_custom_call.1} parent=5 // pred_check_branch
        %287 = sbr.rel (%p284) target = $region59
      $region58: #{tpu_custom_call.1} parent=5 // pred_region
        %s288 = ssub.s32 %s14, 1
        %s289 = sand.u32 %s152, 1
        %s290 = sand.u32 %s152, 1
        %s291 = smul.addr %s290, 32
        %s292 = scalar_lea.vmem [#allocation2], %s291
        // Predicated region
        $region60: #{tpu_custom_call.1} parent=58 // pred_check
          %p293 = pneg %p165
        $region61: #{tpu_custom_call.1} parent=58 // pred_check_branch
          %295 = sbr.rel (%p293) target = $region63
        $region62: #{tpu_custom_call.1} parent=58 // pred_region
          _
        $region63: #{tpu_custom_call.1} parent=58 // pred_fallthru
          _
        %p296 = scmp.lt.s32.totalorder %s25, 1
        %s297 = scalar_select %p296, %s25, 1
        %s298 = smul.addr %s297, 2
        %s299 = scalar_lea.vmem %s0, %s298
        %p300 = pneg %p59
        %p301 = pneg %p56
        %s302 = smul.u32 64, %s26
        %p303 = scmp.lt.s32.totalorder %s302, 383
        %s304 = scalar_select %p303, %s302, 383
        %s305 = smul.addr %s304, 8
        %s306 = scalar_lea.vmem %s1, %s305
        %p307 = pneg %p85
        %p308 = pneg %p82
        %s309 = smul.u32 64, %s26
        %p310 = scmp.lt.s32.totalorder %s309, 383
        %s311 = scalar_select %p310, %s309, 383
        %s312 = smul.addr %s311, 8
        %s313 = scalar_lea.vmem %s2, %s312
        %p314 = pneg %p111
        %p315 = pneg %p108
        %s316 = smul.u32 64, %s26
        %p317 = scmp.lt.s32.totalorder %s316, 383
        %s318 = scalar_select %p317, %s316, 383
        %s319 = smul.addr %s318, 8
        %s320 = scalar_lea.vmem %s3, %s319
        %p321 = pneg %p137
        %p322 = pneg %p134
        %s323 = sand.u32 %s152, 1
        %s324 = sand.u32 %s152, 1
        %s325 = smul.addr %s324, 32
        %s326 = scalar_lea.vmem [#allocation2], %s325
        %p327 = pneg %p165
        %p328 = pneg %p162
        %p329 = pneg %p193
        %p330 = pneg %p190
        %s331 = sand.u32 %s180, 1
        %s332 = scalar_lea.sflag [#allocation4], %s331
        %s333 = sand.u32 %s180, 1
        %s334 = smul.addr %s333, 16
        %s335 = scalar_lea.vmem [#allocation3], %s334
        %p336 = scmp.lt.s32.totalorder %s25, 1
        %s337 = scalar_select %p336, %s25, 1
        %s338 = smul.addr %s337, 2
        %s339 = scalar_lea.vmem %s0, %s338
        %s340 = smul.u32 64, %s26
        %p341 = scmp.lt.s32.totalorder %s340, 383
        %s342 = scalar_select %p341, %s340, 383
        %s343 = smul.addr %s342, 8
        %s344 = scalar_lea.vmem %s1, %s343
        %s345 = smul.u32 64, %s26
        %s346 = smul.u32 64, %s26
        %p347 = scmp.lt.s32.totalorder %s346, 383
        %s348 = scalar_select %p347, %s346, 383
        %s349 = smul.addr %s348, 8
        %s350 = scalar_lea.vmem %s2, %s349
        %s351 = smul.u32 64, %s26
        %s352 = smul.u32 64, %s26
        %p353 = scmp.lt.s32.totalorder %s352, 383
        %s354 = scalar_select %p353, %s352, 383
        %s355 = smul.addr %s354, 8
        %s356 = scalar_lea.vmem %s3, %s355
        %s357 = smul.u32 64, %s26
        %s358 = smul.u32 2, %s24
        %s359 = smul.u32 4, %s26
        %s360 = smul.u32 2, %s24
        %p362 = scmp.eq.s32.totalorder %s26, 0
        // Predicated region
        $region64: #{tpu_custom_call.1} parent=58 // pred_check
          %p363 = pneg %p362
        $region65: #{tpu_custom_call.1} parent=58 // pred_check_branch
          %365 = sbr.rel (%p363) target = $region67
        $region66: #{tpu_custom_call.1} parent=58 // pred_region
          %366 = vst [vmem:[%s335] sm:$0xff] 0.0
          %367 = vst [vmem:[%s335 + $0x8] sm:$0xff] 0.0
        $region67: #{tpu_custom_call.1} parent=58 // pred_fallthru
          _
        %v368 = vld [vmem:[%s344] sm:$0xff]
        %v369 = vld [vmem:[%s344 + $0x8] sm:$0xff]
        %v370 = vld [vmem:[%s344 + $0x10] sm:$0xff]
        %v371 = vld [vmem:[%s344 + $0x18] sm:$0xff]
        %v372 = vld [vmem:[%s344 + $0x20] sm:$0xff]
        %v373 = vld [vmem:[%s344 + $0x28] sm:$0xff]
        %v374 = vld [vmem:[%s344 + $0x30] sm:$0xff]
        %v375 = vld [vmem:[%s344 + $0x38] sm:$0xff]
        %v376 = vld [vmem:[%s344 + $0x40] sm:$0xff]
        %v377 = vld [vmem:[%s344 + $0x48] sm:$0xff]
        %v378 = vld [vmem:[%s344 + $0x50] sm:$0xff]
        %v379 = vld [vmem:[%s344 + $0x58] sm:$0xff]
        %v380 = vld [vmem:[%s344 + $0x60] sm:$0xff]
        %v381 = vld [vmem:[%s344 + $0x68] sm:$0xff]
        %v382 = vld [vmem:[%s344 + $0x70] sm:$0xff]
        %v383 = vld [vmem:[%s344 + $0x78] sm:$0xff]
        %v384 = vld [vmem:[%s344 + $0x80] sm:$0xff]
        %v385 = vld [vmem:[%s344 + $0x88] sm:$0xff]
        %v386 = vld [vmem:[%s344 + $0x90] sm:$0xff]
        %v387 = vld [vmem:[%s344 + $0x98] sm:$0xff]
        %v388 = vld [vmem:[%s344 + $0xa0] sm:$0xff]
        %v389 = vld [vmem:[%s344 + $0xa8] sm:$0xff]
        %v390 = vld [vmem:[%s344 + $0xb0] sm:$0xff]
        %v391 = vld [vmem:[%s344 + $0xb8] sm:$0xff]
        %v392 = vld [vmem:[%s344 + $0xc0] sm:$0xff]
        %v393 = vld [vmem:[%s344 + $0xc8] sm:$0xff]
        %v394 = vld [vmem:[%s344 + $0xd0] sm:$0xff]
        %v395 = vld [vmem:[%s344 + $0xd8] sm:$0xff]
        %v396 = vld [vmem:[%s344 + $0xe0] sm:$0xff]
        %v397 = vld [vmem:[%s344 + $0xe8] sm:$0xff]
        %v398 = vld [vmem:[%s344 + $0xf0] sm:$0xff]
        %v399 = vld [vmem:[%s344 + $0xf8] sm:$0xff]
        %v400 = vld [vmem:[%s344 + $0x100] sm:$0xff]
        %v401 = vld [vmem:[%s344 + $0x108] sm:$0xff]
        %v402 = vld [vmem:[%s344 + $0x110] sm:$0xff]
        %v403 = vld [vmem:[%s344 + $0x118] sm:$0xff]
        %v404 = vld [vmem:[%s344 + $0x120] sm:$0xff]
        %v405 = vld [vmem:[%s344 + $0x128] sm:$0xff]
        %v406 = vld [vmem:[%s344 + $0x130] sm:$0xff]
        %v407 = vld [vmem:[%s344 + $0x138] sm:$0xff]
        %v408 = vld [vmem:[%s344 + $0x140] sm:$0xff]
        %v409 = vld [vmem:[%s344 + $0x148] sm:$0xff]
        %v410 = vld [vmem:[%s344 + $0x150] sm:$0xff]
        %v411 = vld [vmem:[%s344 + $0x158] sm:$0xff]
        %v412 = vld [vmem:[%s344 + $0x160] sm:$0xff]
        %v413 = vld [vmem:[%s344 + $0x168] sm:$0xff]
        %v414 = vld [vmem:[%s344 + $0x170] sm:$0xff]
        %v415 = vld [vmem:[%s344 + $0x178] sm:$0xff]
        %v416 = vld [vmem:[%s344 + $0x180] sm:$0xff]
        %v417 = vld [vmem:[%s344 + $0x188] sm:$0xff]
        %v418 = vld [vmem:[%s344 + $0x190] sm:$0xff]
        %v419 = vld [vmem:[%s344 + $0x198] sm:$0xff]
        %v420 = vld [vmem:[%s344 + $0x1a0] sm:$0xff]
        %v421 = vld [vmem:[%s344 + $0x1a8] sm:$0xff]
        %v422 = vld [vmem:[%s344 + $0x1b0] sm:$0xff]
        %v423 = vld [vmem:[%s344 + $0x1b8] sm:$0xff]
        %v424 = vld [vmem:[%s344 + $0x1c0] sm:$0xff]
        %v425 = vld [vmem:[%s344 + $0x1c8] sm:$0xff]
        %v426 = vld [vmem:[%s344 + $0x1d0] sm:$0xff]
        %v427 = vld [vmem:[%s344 + $0x1d8] sm:$0xff]
        %v428 = vld [vmem:[%s344 + $0x1e0] sm:$0xff]
        %v429 = vld [vmem:[%s344 + $0x1e8] sm:$0xff]
        %v430 = vld [vmem:[%s344 + $0x1f0] sm:$0xff]
        %v431 = vld [vmem:[%s344 + $0x1f8] sm:$0xff]
        %v432 = vld [vmem:[%s350] sm:$0xff]
        %v433 = vld [vmem:[%s350 + $0x8] sm:$0xff]
        %v434 = vld [vmem:[%s350 + $0x10] sm:$0xff]
        %v435 = vld [vmem:[%s350 + $0x18] sm:$0xff]
        %v436 = vld [vmem:[%s350 + $0x20] sm:$0xff]
        %v437 = vld [vmem:[%s350 + $0x28] sm:$0xff]
        %v438 = vld [vmem:[%s350 + $0x30] sm:$0xff]
        %v439 = vld [vmem:[%s350 + $0x38] sm:$0xff]
        %v440 = vld [vmem:[%s350 + $0x40] sm:$0xff]
        %v441 = vld [vmem:[%s350 + $0x48] sm:$0xff]
        %v442 = vld [vmem:[%s350 + $0x50] sm:$0xff]
        %v443 = vld [vmem:[%s350 + $0x58] sm:$0xff]
        %v444 = vld [vmem:[%s350 + $0x60] sm:$0xff]
        %v445 = vld [vmem:[%s350 + $0x68] sm:$0xff]
        %v446 = vld [vmem:[%s350 + $0x70] sm:$0xff]
        %v447 = vld [vmem:[%s350 + $0x78] sm:$0xff]
        %v448 = vld [vmem:[%s350 + $0x80] sm:$0xff]
        %v449 = vld [vmem:[%s350 + $0x88] sm:$0xff]
        %v450 = vld [vmem:[%s350 + $0x90] sm:$0xff]
        %v451 = vld [vmem:[%s350 + $0x98] sm:$0xff]
        %v452 = vld [vmem:[%s350 + $0xa0] sm:$0xff]
        %v453 = vld [vmem:[%s350 + $0xa8] sm:$0xff]
        %v454 = vld [vmem:[%s350 + $0xb0] sm:$0xff]
        %v455 = vld [vmem:[%s350 + $0xb8] sm:$0xff]
        %v456 = vld [vmem:[%s350 + $0xc0] sm:$0xff]
        %v457 = vld [vmem:[%s350 + $0xc8] sm:$0xff]
        %v458 = vld [vmem:[%s350 + $0xd0] sm:$0xff]
        %v459 = vld [vmem:[%s350 + $0xd8] sm:$0xff]
        %v460 = vld [vmem:[%s350 + $0xe0] sm:$0xff]
        %v461 = vld [vmem:[%s350 + $0xe8] sm:$0xff]
        %v462 = vld [vmem:[%s350 + $0xf0] sm:$0xff]
        %v463 = vld [vmem:[%s350 + $0xf8] sm:$0xff]
        %v464 = vld [vmem:[%s350 + $0x100] sm:$0xff]
        %v465 = vld [vmem:[%s350 + $0x108] sm:$0xff]
        %v466 = vld [vmem:[%s350 + $0x110] sm:$0xff]
        %v467 = vld [vmem:[%s350 + $0x118] sm:$0xff]
        %v468 = vld [vmem:[%s350 + $0x120] sm:$0xff]
        %v469 = vld [vmem:[%s350 + $0x128] sm:$0xff]
        %v470 = vld [vmem:[%s350 + $0x130] sm:$0xff]
        %v471 = vld [vmem:[%s350 + $0x138] sm:$0xff]
        %v472 = vld [vmem:[%s350 + $0x140] sm:$0xff]
        %v473 = vld [vmem:[%s350 + $0x148] sm:$0xff]
        %v474 = vld [vmem:[%s350 + $0x150] sm:$0xff]
        %v475 = vld [vmem:[%s350 + $0x158] sm:$0xff]
        %v476 = vld [vmem:[%s350 + $0x160] sm:$0xff]
        %v477 = vld [vmem:[%s350 + $0x168] sm:$0xff]
        %v478 = vld [vmem:[%s350 + $0x170] sm:$0xff]
        %v479 = vld [vmem:[%s350 + $0x178] sm:$0xff]
        %v480 = vld [vmem:[%s350 + $0x180] sm:$0xff]
        %v481 = vld [vmem:[%s350 + $0x188] sm:$0xff]
        %v482 = vld [vmem:[%s350 + $0x190] sm:$0xff]
        %v483 = vld [vmem:[%s350 + $0x198] sm:$0xff]
        %v484 = vld [vmem:[%s350 + $0x1a0] sm:$0xff]
        %v485 = vld [vmem:[%s350 + $0x1a8] sm:$0xff]
        %v486 = vld [vmem:[%s350 + $0x1b0] sm:$0xff]
        %v487 = vld [vmem:[%s350 + $0x1b8] sm:$0xff]
        %v488 = vld [vmem:[%s350 + $0x1c0] sm:$0xff]
        %v489 = vld [vmem:[%s350 + $0x1c8] sm:$0xff]
        %v490 = vld [vmem:[%s350 + $0x1d0] sm:$0xff]
        %v491 = vld [vmem:[%s350 + $0x1d8] sm:$0xff]
        %v492 = vld [vmem:[%s350 + $0x1e0] sm:$0xff]
        %v493 = vld [vmem:[%s350 + $0x1e8] sm:$0xff]
        %v494 = vld [vmem:[%s350 + $0x1f0] sm:$0xff]
        %v495 = vld [vmem:[%s350 + $0x1f8] sm:$0xff]
        %v496 = vld [vmem:[%s356] sm:$0xff]
        %v497 = vld [vmem:[%s356 + $0x8] sm:$0xff]
        %v498 = vld [vmem:[%s356 + $0x10] sm:$0xff]
        %v499 = vld [vmem:[%s356 + $0x18] sm:$0xff]
        %v500 = vld [vmem:[%s356 + $0x20] sm:$0xff]
        %v501 = vld [vmem:[%s356 + $0x28] sm:$0xff]
        %v502 = vld [vmem:[%s356 + $0x30] sm:$0xff]
        %v503 = vld [vmem:[%s356 + $0x38] sm:$0xff]
        %v504 = vld [vmem:[%s356 + $0x40] sm:$0xff]
        %v505 = vld [vmem:[%s356 + $0x48] sm:$0xff]
        %v506 = vld [vmem:[%s356 + $0x50] sm:$0xff]
        %v507 = vld [vmem:[%s356 + $0x58] sm:$0xff]
        %v508 = vld [vmem:[%s356 + $0x60] sm:$0xff]
        %v509 = vld [vmem:[%s356 + $0x68] sm:$0xff]
        %v510 = vld [vmem:[%s356 + $0x70] sm:$0xff]
        %v511 = vld [vmem:[%s356 + $0x78] sm:$0xff]
        %v512 = vld [vmem:[%s356 + $0x80] sm:$0xff]
        %v513 = vld [vmem:[%s356 + $0x88] sm:$0xff]
        %v514 = vld [vmem:[%s356 + $0x90] sm:$0xff]
        %v515 = vld [vmem:[%s356 + $0x98] sm:$0xff]
        %v516 = vld [vmem:[%s356 + $0xa0] sm:$0xff]
        %v517 = vld [vmem:[%s356 + $0xa8] sm:$0xff]
        %v518 = vld [vmem:[%s356 + $0xb0] sm:$0xff]
        %v519 = vld [vmem:[%s356 + $0xb8] sm:$0xff]
        %v520 = vld [vmem:[%s356 + $0xc0] sm:$0xff]
        %v521 = vld [vmem:[%s356 + $0xc8] sm:$0xff]
        %v522 = vld [vmem:[%s356 + $0xd0] sm:$0xff]
        %v523 = vld [vmem:[%s356 + $0xd8] sm:$0xff]
        %v524 = vld [vmem:[%s356 + $0xe0] sm:$0xff]
        %v525 = vld [vmem:[%s356 + $0xe8] sm:$0xff]
        %v526 = vld [vmem:[%s356 + $0xf0] sm:$0xff]
        %v527 = vld [vmem:[%s356 + $0xf8] sm:$0xff]
        %v528 = vld [vmem:[%s356 + $0x100] sm:$0xff]
        %v529 = vld [vmem:[%s356 + $0x108] sm:$0xff]
        %v530 = vld [vmem:[%s356 + $0x110] sm:$0xff]
        %v531 = vld [vmem:[%s356 + $0x118] sm:$0xff]
        %v532 = vld [vmem:[%s356 + $0x120] sm:$0xff]
        %v533 = vld [vmem:[%s356 + $0x128] sm:$0xff]
        %v534 = vld [vmem:[%s356 + $0x130] sm:$0xff]
        %v535 = vld [vmem:[%s356 + $0x138] sm:$0xff]
        %v536 = vld [vmem:[%s356 + $0x140] sm:$0xff]
        %v537 = vld [vmem:[%s356 + $0x148] sm:$0xff]
        %v538 = vld [vmem:[%s356 + $0x150] sm:$0xff]
        %v539 = vld [vmem:[%s356 + $0x158] sm:$0xff]
        %v540 = vld [vmem:[%s356 + $0x160] sm:$0xff]
        %v541 = vld [vmem:[%s356 + $0x168] sm:$0xff]
        %v542 = vld [vmem:[%s356 + $0x170] sm:$0xff]
        %v543 = vld [vmem:[%s356 + $0x178] sm:$0xff]
        %v544 = vld [vmem:[%s356 + $0x180] sm:$0xff]
        %v545 = vld [vmem:[%s356 + $0x188] sm:$0xff]
        %v546 = vld [vmem:[%s356 + $0x190] sm:$0xff]
        %v547 = vld [vmem:[%s356 + $0x198] sm:$0xff]
        %v548 = vld [vmem:[%s356 + $0x1a0] sm:$0xff]
        %v549 = vld [vmem:[%s356 + $0x1a8] sm:$0xff]
        %v550 = vld [vmem:[%s356 + $0x1b0] sm:$0xff]
        %v551 = vld [vmem:[%s356 + $0x1b8] sm:$0xff]
        %v552 = vld [vmem:[%s356 + $0x1c0] sm:$0xff]
        %v553 = vld [vmem:[%s356 + $0x1c8] sm:$0xff]
        %v554 = vld [vmem:[%s356 + $0x1d0] sm:$0xff]
        %v555 = vld [vmem:[%s356 + $0x1d8] sm:$0xff]
        %v556 = vld [vmem:[%s356 + $0x1e0] sm:$0xff]
        %v557 = vld [vmem:[%s356 + $0x1e8] sm:$0xff]
        %v558 = vld [vmem:[%s356 + $0x1f0] sm:$0xff]
        %v559 = vld [vmem:[%s356 + $0x1f8] sm:$0xff]
        %v560 = vld [vmem:[%s292] sm:$0xff]
        %v561 = vld [vmem:[%s292 + $0x8] sm:$0xff]
        %v562 = vld [vmem:[%s292 + $0x10] sm:$0xff]
        %v563 = vld [vmem:[%s292 + $0x18] sm:$0xff]
        %v564 = vld [vmem:[%s339] sm:$0x1]
        %v565 = vld [vmem:[%s339 + $0x1] sm:$0x1]
        %v566 = vlaneseq
        %v567 = vshrl.u32 %v566, 7
        %v568 = vsub.s32 0, %v567
        %v569 = vrot.slane %v564, %v568
        %571 = vset.pattern.permute.xlu0 0
        %572 = vperm.xlu0 %571, %v368
        %v573 = vpop.permute.xlu0 %572
        %576 = vset.pattern.permute.xlu0 0
        %577 = vperm.xlu0 %576, %v369
        %v578 = vpop.permute.xlu0 %577
        %581 = vset.pattern.permute.xlu0 0
        %582 = vperm.xlu0 %581, %v370
        %v583 = vpop.permute.xlu0 %582
        %586 = vset.pattern.permute.xlu0 0
        %587 = vperm.xlu0 %586, %v371
        %v588 = vpop.permute.xlu0 %587
        %591 = vset.pattern.permute.xlu0 0
        %592 = vperm.xlu0 %591, %v372
        %v593 = vpop.permute.xlu0 %592
        %596 = vset.pattern.permute.xlu0 0
        %597 = vperm.xlu0 %596, %v373
        %v598 = vpop.permute.xlu0 %597
        %601 = vset.pattern.permute.xlu0 0
        %602 = vperm.xlu0 %601, %v374
        %v603 = vpop.permute.xlu0 %602
        %606 = vset.pattern.permute.xlu0 0
        %607 = vperm.xlu0 %606, %v375
        %v608 = vpop.permute.xlu0 %607
        %611 = vset.pattern.permute.xlu0 0
        %612 = vperm.xlu0 %611, %v376
        %v613 = vpop.permute.xlu0 %612
        %616 = vset.pattern.permute.xlu0 0
        %617 = vperm.xlu0 %616, %v377
        %v618 = vpop.permute.xlu0 %617
        %621 = vset.pattern.permute.xlu0 0
        %622 = vperm.xlu0 %621, %v378
        %v623 = vpop.permute.xlu0 %622
        %626 = vset.pattern.permute.xlu0 0
        %627 = vperm.xlu0 %626, %v379
        %v628 = vpop.permute.xlu0 %627
        %631 = vset.pattern.permute.xlu0 0
        %632 = vperm.xlu0 %631, %v380
        %v633 = vpop.permute.xlu0 %632
        %636 = vset.pattern.permute.xlu0 0
        %637 = vperm.xlu0 %636, %v381
        %v638 = vpop.permute.xlu0 %637
        %641 = vset.pattern.permute.xlu0 0
        %642 = vperm.xlu0 %641, %v382
        %v643 = vpop.permute.xlu0 %642
        %646 = vset.pattern.permute.xlu0 0
        %647 = vperm.xlu0 %646, %v383
        %v648 = vpop.permute.xlu0 %647
        %651 = vset.pattern.permute.xlu0 0
        %652 = vperm.xlu0 %651, %v384
        %v653 = vpop.permute.xlu0 %652
        %656 = vset.pattern.permute.xlu0 0
        %657 = vperm.xlu0 %656, %v385
        %v658 = vpop.permute.xlu0 %657
        %661 = vset.pattern.permute.xlu0 0
        %662 = vperm.xlu0 %661, %v386
        %v663 = vpop.permute.xlu0 %662
        %666 = vset.pattern.permute.xlu0 0
        %667 = vperm.xlu0 %666, %v387
        %v668 = vpop.permute.xlu0 %667
        %671 = vset.pattern.permute.xlu0 0
        %672 = vperm.xlu0 %671, %v388
        %v673 = vpop.permute.xlu0 %672
        %676 = vset.pattern.permute.xlu0 0
        %677 = vperm.xlu0 %676, %v389
        %v678 = vpop.permute.xlu0 %677
        %681 = vset.pattern.permute.xlu0 0
        %682 = vperm.xlu0 %681, %v390
        %v683 = vpop.permute.xlu0 %682
        %686 = vset.pattern.permute.xlu0 0
        %687 = vperm.xlu0 %686, %v391
        %v688 = vpop.permute.xlu0 %687
        %691 = vset.pattern.permute.xlu0 0
        %692 = vperm.xlu0 %691, %v392
        %v693 = vpop.permute.xlu0 %692
        %696 = vset.pattern.permute.xlu0 0
        %697 = vperm.xlu0 %696, %v393
        %v698 = vpop.permute.xlu0 %697
        %701 = vset.pattern.permute.xlu0 0
        %702 = vperm.xlu0 %701, %v394
        %v703 = vpop.permute.xlu0 %702
        %706 = vset.pattern.permute.xlu0 0
        %707 = vperm.xlu0 %706, %v395
        %v708 = vpop.permute.xlu0 %707
        %711 = vset.pattern.permute.xlu0 0
        %712 = vperm.xlu0 %711, %v396
        %v713 = vpop.permute.xlu0 %712
        %716 = vset.pattern.permute.xlu0 0
        %717 = vperm.xlu0 %716, %v397
        %v718 = vpop.permute.xlu0 %717
        %721 = vset.pattern.permute.xlu0 0
        %722 = vperm.xlu0 %721, %v398
        %v723 = vpop.permute.xlu0 %722
        %726 = vset.pattern.permute.xlu0 0
        %727 = vperm.xlu0 %726, %v399
        %v728 = vpop.permute.xlu0 %727
        %731 = vset.pattern.permute.xlu0 0
        %732 = vperm.xlu0 %731, %v400
        %v733 = vpop.permute.xlu0 %732
        %736 = vset.pattern.permute.xlu0 0
        %737 = vperm.xlu0 %736, %v401
        %v738 = vpop.permute.xlu0 %737
        %741 = vset.pattern.permute.xlu0 0
        %742 = vperm.xlu0 %741, %v402
        %v743 = vpop.permute.xlu0 %742
        %746 = vset.pattern.permute.xlu0 0
        %747 = vperm.xlu0 %746, %v403
        %v748 = vpop.permute.xlu0 %747
        %751 = vset.pattern.permute.xlu0 0
        %752 = vperm.xlu0 %751, %v404
        %v753 = vpop.permute.xlu0 %752
        %756 = vset.pattern.permute.xlu0 0
        %757 = vperm.xlu0 %756, %v405
        %v758 = vpop.permute.xlu0 %757
        %761 = vset.pattern.permute.xlu0 0
        %762 = vperm.xlu0 %761, %v406
        %v763 = vpop.permute.xlu0 %762
        %766 = vset.pattern.permute.xlu0 0
        %767 = vperm.xlu0 %766, %v407
        %v768 = vpop.permute.xlu0 %767
        %771 = vset.pattern.permute.xlu0 0
        %772 = vperm.xlu0 %771, %v408
        %v773 = vpop.permute.xlu0 %772
        %776 = vset.pattern.permute.xlu0 0
        %777 = vperm.xlu0 %776, %v409
        %v778 = vpop.permute.xlu0 %777
        %781 = vset.pattern.permute.xlu0 0
        %782 = vperm.xlu0 %781, %v410
        %v783 = vpop.permute.xlu0 %782
        %786 = vset.pattern.permute.xlu0 0
        %787 = vperm.xlu0 %786, %v411
        %v788 = vpop.permute.xlu0 %787
        %791 = vset.pattern.permute.xlu0 0
        %792 = vperm.xlu0 %791, %v412
        %v793 = vpop.permute.xlu0 %792
        %796 = vset.pattern.permute.xlu0 0
        %797 = vperm.xlu0 %796, %v413
        %v798 = vpop.permute.xlu0 %797
        %801 = vset.pattern.permute.xlu0 0
        %802 = vperm.xlu0 %801, %v414
        %v803 = vpop.permute.xlu0 %802
        %806 = vset.pattern.permute.xlu0 0
        %807 = vperm.xlu0 %806, %v415
        %v808 = vpop.permute.xlu0 %807
        %811 = vset.pattern.permute.xlu0 0
        %812 = vperm.xlu0 %811, %v416
        %v813 = vpop.permute.xlu0 %812
        %816 = vset.pattern.permute.xlu0 0
        %817 = vperm.xlu0 %816, %v417
        %v818 = vpop.permute.xlu0 %817
        %821 = vset.pattern.permute.xlu0 0
        %822 = vperm.xlu0 %821, %v418
        %v823 = vpop.permute.xlu0 %822
        %826 = vset.pattern.permute.xlu0 0
        %827 = vperm.xlu0 %826, %v419
        %v828 = vpop.permute.xlu0 %827
        %831 = vset.pattern.permute.xlu0 0
        %832 = vperm.xlu0 %831, %v420
        %v833 = vpop.permute.xlu0 %832
        %836 = vset.pattern.permute.xlu0 0
        %837 = vperm.xlu0 %836, %v421
        %v838 = vpop.permute.xlu0 %837
        %841 = vset.pattern.permute.xlu0 0
        %842 = vperm.xlu0 %841, %v422
        %v843 = vpop.permute.xlu0 %842
        %846 = vset.pattern.permute.xlu0 0
        %847 = vperm.xlu0 %846, %v423
        %v848 = vpop.permute.xlu0 %847
        %851 = vset.pattern.permute.xlu0 0
        %852 = vperm.xlu0 %851, %v424
        %v853 = vpop.permute.xlu0 %852
        %856 = vset.pattern.permute.xlu0 0
        %857 = vperm.xlu0 %856, %v425
        %v858 = vpop.permute.xlu0 %857
        %861 = vset.pattern.permute.xlu0 0
        %862 = vperm.xlu0 %861, %v426
        %v863 = vpop.permute.xlu0 %862
        %866 = vset.pattern.permute.xlu0 0
        %867 = vperm.xlu0 %866, %v427
        %v868 = vpop.permute.xlu0 %867
        %871 = vset.pattern.permute.xlu0 0
        %872 = vperm.xlu0 %871, %v428
        %v873 = vpop.permute.xlu0 %872
        %876 = vset.pattern.permute.xlu0 0
        %877 = vperm.xlu0 %876, %v429
        %v878 = vpop.permute.xlu0 %877
        %881 = vset.pattern.permute.xlu0 0
        %882 = vperm.xlu0 %881, %v430
        %v883 = vpop.permute.xlu0 %882
        %886 = vset.pattern.permute.xlu0 0
        %887 = vperm.xlu0 %886, %v431
        %v888 = vpop.permute.xlu0 %887
        %v890 = vmul.f32 %v569, %v573
        %v891 = vmul.f32 %v569, %v578
        %v892 = vmul.f32 %v569, %v583
        %v893 = vmul.f32 %v569, %v588
        %v894 = vmul.f32 %v569, %v593
        %v895 = vmul.f32 %v569, %v598
        %v896 = vmul.f32 %v569, %v603
        %v897 = vmul.f32 %v569, %v608
        %v898 = vmul.f32 %v569, %v613
        %v899 = vmul.f32 %v569, %v618
        %v900 = vmul.f32 %v569, %v623
        %v901 = vmul.f32 %v569, %v628
        %v902 = vmul.f32 %v569, %v633
        %v903 = vmul.f32 %v569, %v638
        %v904 = vmul.f32 %v569, %v643
        %v905 = vmul.f32 %v569, %v648
        %v906 = vmul.f32 %v569, %v653
        %v907 = vmul.f32 %v569, %v658
        %v908 = vmul.f32 %v569, %v663
        %v909 = vmul.f32 %v569, %v668
        %v910 = vmul.f32 %v569, %v673
        %v911 = vmul.f32 %v569, %v678
        %v912 = vmul.f32 %v569, %v683
        %v913 = vmul.f32 %v569, %v688
        %v914 = vmul.f32 %v569, %v693
        %v915 = vmul.f32 %v569, %v698
        %v916 = vmul.f32 %v569, %v703
        %v917 = vmul.f32 %v569, %v708
        %v918 = vmul.f32 %v569, %v713
        %v919 = vmul.f32 %v569, %v718
        %v920 = vmul.f32 %v569, %v723
        %v921 = vmul.f32 %v569, %v728
        %v922 = vmul.f32 %v569, %v733
        %v923 = vmul.f32 %v569, %v738
        %v924 = vmul.f32 %v569, %v743
        %v925 = vmul.f32 %v569, %v748
        %v926 = vmul.f32 %v569, %v753
        %v927 = vmul.f32 %v569, %v758
        %v928 = vmul.f32 %v569, %v763
        %v929 = vmul.f32 %v569, %v768
        %v930 = vmul.f32 %v569, %v773
        %v931 = vmul.f32 %v569, %v778
        %v932 = vmul.f32 %v569, %v783
        %v933 = vmul.f32 %v569, %v788
        %v934 = vmul.f32 %v569, %v793
        %v935 = vmul.f32 %v569, %v798
        %v936 = vmul.f32 %v569, %v803
        %v937 = vmul.f32 %v569, %v808
        %v938 = vmul.f32 %v569, %v813
        %v939 = vmul.f32 %v569, %v818
        %v940 = vmul.f32 %v569, %v823
        %v941 = vmul.f32 %v569, %v828
        %v942 = vmul.f32 %v569, %v833
        %v943 = vmul.f32 %v569, %v838
        %v944 = vmul.f32 %v569, %v843
        %v945 = vmul.f32 %v569, %v848
        %v946 = vmul.f32 %v569, %v853
        %v947 = vmul.f32 %v569, %v858
        %v948 = vmul.f32 %v569, %v863
        %v949 = vmul.f32 %v569, %v868
        %v950 = vmul.f32 %v569, %v873
        %v951 = vmul.f32 %v569, %v878
        %v952 = vmul.f32 %v569, %v883
        %v953 = vmul.f32 %v569, %v888
        %v954 = vlaneseq
        %v955 = vshrl.u32 %v954, 7
        %v956 = vsub.s32 0, %v955
        %v957 = vrot.slane %v565, %v956
        %959 = vset.pattern.permute.xlu0 0
        %960 = vperm.xlu0 %959, %v432
        %v961 = vpop.permute.xlu0 %960
        %964 = vset.pattern.permute.xlu0 0
        %965 = vperm.xlu0 %964, %v433
        %v966 = vpop.permute.xlu0 %965
        %969 = vset.pattern.permute.xlu0 0
        %970 = vperm.xlu0 %969, %v434
        %v971 = vpop.permute.xlu0 %970
        %974 = vset.pattern.permute.xlu0 0
        %975 = vperm.xlu0 %974, %v435
        %v976 = vpop.permute.xlu0 %975
        %979 = vset.pattern.permute.xlu0 0
        %980 = vperm.xlu0 %979, %v436
        %v981 = vpop.permute.xlu0 %980
        %984 = vset.pattern.permute.xlu0 0
        %985 = vperm.xlu0 %984, %v437
        %v986 = vpop.permute.xlu0 %985
        %989 = vset.pattern.permute.xlu0 0
        %990 = vperm.xlu0 %989, %v438
        %v991 = vpop.permute.xlu0 %990
        %994 = vset.pattern.permute.xlu0 0
        %995 = vperm.xlu0 %994, %v439
        %v996 = vpop.permute.xlu0 %995
        %999 = vset.pattern.permute.xlu0 0
        %1000 = vperm.xlu0 %999, %v440
        %v1001 = vpop.permute.xlu0 %1000
        %1004 = vset.pattern.permute.xlu0 0
        %1005 = vperm.xlu0 %1004, %v441
        %v1006 = vpop.permute.xlu0 %1005
        %1009 = vset.pattern.permute.xlu0 0
        %1010 = vperm.xlu0 %1009, %v442
        %v1011 = vpop.permute.xlu0 %1010
        %1014 = vset.pattern.permute.xlu0 0
        %1015 = vperm.xlu0 %1014, %v443
        %v1016 = vpop.permute.xlu0 %1015
        %1019 = vset.pattern.permute.xlu0 0
        %1020 = vperm.xlu0 %1019, %v444
        %v1021 = vpop.permute.xlu0 %1020
        %1024 = vset.pattern.permute.xlu0 0
        %1025 = vperm.xlu0 %1024, %v445
        %v1026 = vpop.permute.xlu0 %1025
        %1029 = vset.pattern.permute.xlu0 0
        %1030 = vperm.xlu0 %1029, %v446
        %v1031 = vpop.permute.xlu0 %1030
        %1034 = vset.pattern.permute.xlu0 0
        %1035 = vperm.xlu0 %1034, %v447
        %v1036 = vpop.permute.xlu0 %1035
        %1039 = vset.pattern.permute.xlu0 0
        %1040 = vperm.xlu0 %1039, %v448
        %v1041 = vpop.permute.xlu0 %1040
        %1044 = vset.pattern.permute.xlu0 0
        %1045 = vperm.xlu0 %1044, %v449
        %v1046 = vpop.permute.xlu0 %1045
        %1049 = vset.pattern.permute.xlu0 0
        %1050 = vperm.xlu0 %1049, %v450
        %v1051 = vpop.permute.xlu0 %1050
        %1054 = vset.pattern.permute.xlu0 0
        %1055 = vperm.xlu0 %1054, %v451
        %v1056 = vpop.permute.xlu0 %1055
        %1059 = vset.pattern.permute.xlu0 0
        %1060 = vperm.xlu0 %1059, %v452
        %v1061 = vpop.permute.xlu0 %1060
        %1064 = vset.pattern.permute.xlu0 0
        %1065 = vperm.xlu0 %1064, %v453
        %v1066 = vpop.permute.xlu0 %1065
        %1069 = vset.pattern.permute.xlu0 0
        %1070 = vperm.xlu0 %1069, %v454
        %v1071 = vpop.permute.xlu0 %1070
        %1074 = vset.pattern.permute.xlu0 0
        %1075 = vperm.xlu0 %1074, %v455
        %v1076 = vpop.permute.xlu0 %1075
        %1079 = vset.pattern.permute.xlu0 0
        %1080 = vperm.xlu0 %1079, %v456
        %v1081 = vpop.permute.xlu0 %1080
        %1084 = vset.pattern.permute.xlu0 0
        %1085 = vperm.xlu0 %1084, %v457
        %v1086 = vpop.permute.xlu0 %1085
        %1089 = vset.pattern.permute.xlu0 0
        %1090 = vperm.xlu0 %1089, %v458
        %v1091 = vpop.permute.xlu0 %1090
        %1094 = vset.pattern.permute.xlu0 0
        %1095 = vperm.xlu0 %1094, %v459
        %v1096 = vpop.permute.xlu0 %1095
        %1099 = vset.pattern.permute.xlu0 0
        %1100 = vperm.xlu0 %1099, %v460
        %v1101 = vpop.permute.xlu0 %1100
        %1104 = vset.pattern.permute.xlu0 0
        %1105 = vperm.xlu0 %1104, %v461
        %v1106 = vpop.permute.xlu0 %1105
        %1109 = vset.pattern.permute.xlu0 0
        %1110 = vperm.xlu0 %1109, %v462
        %v1111 = vpop.permute.xlu0 %1110
        %1114 = vset.pattern.permute.xlu0 0
        %1115 = vperm.xlu0 %1114, %v463
        %v1116 = vpop.permute.xlu0 %1115
        %1119 = vset.pattern.permute.xlu0 0
        %1120 = vperm.xlu0 %1119, %v464
        %v1121 = vpop.permute.xlu0 %1120
        %1124 = vset.pattern.permute.xlu0 0
        %1125 = vperm.xlu0 %1124, %v465
        %v1126 = vpop.permute.xlu0 %1125
        %1129 = vset.pattern.permute.xlu0 0
        %1130 = vperm.xlu0 %1129, %v466
        %v1131 = vpop.permute.xlu0 %1130
        %1134 = vset.pattern.permute.xlu0 0
        %1135 = vperm.xlu0 %1134, %v467
        %v1136 = vpop.permute.xlu0 %1135
        %1139 = vset.pattern.permute.xlu0 0
        %1140 = vperm.xlu0 %1139, %v468
        %v1141 = vpop.permute.xlu0 %1140
        %1144 = vset.pattern.permute.xlu0 0
        %1145 = vperm.xlu0 %1144, %v469
        %v1146 = vpop.permute.xlu0 %1145
        %1149 = vset.pattern.permute.xlu0 0
        %1150 = vperm.xlu0 %1149, %v470
        %v1151 = vpop.permute.xlu0 %1150
        %1154 = vset.pattern.permute.xlu0 0
        %1155 = vperm.xlu0 %1154, %v471
        %v1156 = vpop.permute.xlu0 %1155
        %1159 = vset.pattern.permute.xlu0 0
        %1160 = vperm.xlu0 %1159, %v472
        %v1161 = vpop.permute.xlu0 %1160
        %1164 = vset.pattern.permute.xlu0 0
        %1165 = vperm.xlu0 %1164, %v473
        %v1166 = vpop.permute.xlu0 %1165
        %1169 = vset.pattern.permute.xlu0 0
        %1170 = vperm.xlu0 %1169, %v474
        %v1171 = vpop.permute.xlu0 %1170
        %1174 = vset.pattern.permute.xlu0 0
        %1175 = vperm.xlu0 %1174, %v475
        %v1176 = vpop.permute.xlu0 %1175
        %1179 = vset.pattern.permute.xlu0 0
        %1180 = vperm.xlu0 %1179, %v476
        %v1181 = vpop.permute.xlu0 %1180
        %1184 = vset.pattern.permute.xlu0 0
        %1185 = vperm.xlu0 %1184, %v477
        %v1186 = vpop.permute.xlu0 %1185
        %1189 = vset.pattern.permute.xlu0 0
        %1190 = vperm.xlu0 %1189, %v478
        %v1191 = vpop.permute.xlu0 %1190
        %1194 = vset.pattern.permute.xlu0 0
        %1195 = vperm.xlu0 %1194, %v479
        %v1196 = vpop.permute.xlu0 %1195
        %1199 = vset.pattern.permute.xlu0 0
        %1200 = vperm.xlu0 %1199, %v480
        %v1201 = vpop.permute.xlu0 %1200
        %1204 = vset.pattern.permute.xlu0 0
        %1205 = vperm.xlu0 %1204, %v481
        %v1206 = vpop.permute.xlu0 %1205
        %1209 = vset.pattern.permute.xlu0 0
        %1210 = vperm.xlu0 %1209, %v482
        %v1211 = vpop.permute.xlu0 %1210
        %1214 = vset.pattern.permute.xlu0 0
        %1215 = vperm.xlu0 %1214, %v483
        %v1216 = vpop.permute.xlu0 %1215
        %1219 = vset.pattern.permute.xlu0 0
        %1220 = vperm.xlu0 %1219, %v484
        %v1221 = vpop.permute.xlu0 %1220
        %1224 = vset.pattern.permute.xlu0 0
        %1225 = vperm.xlu0 %1224, %v485
        %v1226 = vpop.permute.xlu0 %1225
        %1229 = vset.pattern.permute.xlu0 0
        %1230 = vperm.xlu0 %1229, %v486
        %v1231 = vpop.permute.xlu0 %1230
        %1234 = vset.pattern.permute.xlu0 0
        %1235 = vperm.xlu0 %1234, %v487
        %v1236 = vpop.permute.xlu0 %1235
        %1239 = vset.pattern.permute.xlu0 0
        %1240 = vperm.xlu0 %1239, %v488
        %v1241 = vpop.permute.xlu0 %1240
        %1244 = vset.pattern.permute.xlu0 0
        %1245 = vperm.xlu0 %1244, %v489
        %v1246 = vpop.permute.xlu0 %1245
        %1249 = vset.pattern.permute.xlu0 0
        %1250 = vperm.xlu0 %1249, %v490
        %v1251 = vpop.permute.xlu0 %1250
        %1254 = vset.pattern.permute.xlu0 0
        %1255 = vperm.xlu0 %1254, %v491
        %v1256 = vpop.permute.xlu0 %1255
        %1259 = vset.pattern.permute.xlu0 0
        %1260 = vperm.xlu0 %1259, %v492
        %v1261 = vpop.permute.xlu0 %1260
        %1264 = vset.pattern.permute.xlu0 0
        %1265 = vperm.xlu0 %1264, %v493
        %v1266 = vpop.permute.xlu0 %1265
        %1269 = vset.pattern.permute.xlu0 0
        %1270 = vperm.xlu0 %1269, %v494
        %v1271 = vpop.permute.xlu0 %1270
        %1274 = vset.pattern.permute.xlu0 0
        %1275 = vperm.xlu0 %1274, %v495
        %v1276 = vpop.permute.xlu0 %1275
        %v1278 = vmul.f32 %v957, %v961
        %v1279 = vmul.f32 %v957, %v966
        %v1280 = vmul.f32 %v957, %v971
        %v1281 = vmul.f32 %v957, %v976
        %v1282 = vmul.f32 %v957, %v981
        %v1283 = vmul.f32 %v957, %v986
        %v1284 = vmul.f32 %v957, %v991
        %v1285 = vmul.f32 %v957, %v996
        %v1286 = vmul.f32 %v957, %v1001
        %v1287 = vmul.f32 %v957, %v1006
        %v1288 = vmul.f32 %v957, %v1011
        %v1289 = vmul.f32 %v957, %v1016
        %v1290 = vmul.f32 %v957, %v1021
        %v1291 = vmul.f32 %v957, %v1026
        %v1292 = vmul.f32 %v957, %v1031
        %v1293 = vmul.f32 %v957, %v1036
        %v1294 = vmul.f32 %v957, %v1041
        %v1295 = vmul.f32 %v957, %v1046
        %v1296 = vmul.f32 %v957, %v1051
        %v1297 = vmul.f32 %v957, %v1056
        %v1298 = vmul.f32 %v957, %v1061
        %v1299 = vmul.f32 %v957, %v1066
        %v1300 = vmul.f32 %v957, %v1071
        %v1301 = vmul.f32 %v957, %v1076
        %v1302 = vmul.f32 %v957, %v1081
        %v1303 = vmul.f32 %v957, %v1086
        %v1304 = vmul.f32 %v957, %v1091
        %v1305 = vmul.f32 %v957, %v1096
        %v1306 = vmul.f32 %v957, %v1101
        %v1307 = vmul.f32 %v957, %v1106
        %v1308 = vmul.f32 %v957, %v1111
        %v1309 = vmul.f32 %v957, %v1116
        %v1310 = vmul.f32 %v957, %v1121
        %v1311 = vmul.f32 %v957, %v1126
        %v1312 = vmul.f32 %v957, %v1131
        %v1313 = vmul.f32 %v957, %v1136
        %v1314 = vmul.f32 %v957, %v1141
        %v1315 = vmul.f32 %v957, %v1146
        %v1316 = vmul.f32 %v957, %v1151
        %v1317 = vmul.f32 %v957, %v1156
        %v1318 = vmul.f32 %v957, %v1161
        %v1319 = vmul.f32 %v957, %v1166
        %v1320 = vmul.f32 %v957, %v1171
        %v1321 = vmul.f32 %v957, %v1176
        %v1322 = vmul.f32 %v957, %v1181
        %v1323 = vmul.f32 %v957, %v1186
        %v1324 = vmul.f32 %v957, %v1191
        %v1325 = vmul.f32 %v957, %v1196
        %v1326 = vmul.f32 %v957, %v1201
        %v1327 = vmul.f32 %v957, %v1206
        %v1328 = vmul.f32 %v957, %v1211
        %v1329 = vmul.f32 %v957, %v1216
        %v1330 = vmul.f32 %v957, %v1221
        %v1331 = vmul.f32 %v957, %v1226
        %v1332 = vmul.f32 %v957, %v1231
        %v1333 = vmul.f32 %v957, %v1236
        %v1334 = vmul.f32 %v957, %v1241
        %v1335 = vmul.f32 %v957, %v1246
        %v1336 = vmul.f32 %v957, %v1251
        %v1337 = vmul.f32 %v957, %v1256
        %v1338 = vmul.f32 %v957, %v1261
        %v1339 = vmul.f32 %v957, %v1266
        %v1340 = vmul.f32 %v957, %v1271
        %v1341 = vmul.f32 %v957, %v1276
        %v1342 = vadd.f32 %v890, %v1278
        %v1343 = vadd.f32 %v891, %v1279
        %v1344 = vadd.f32 %v892, %v1280
        %v1345 = vadd.f32 %v893, %v1281
        %v1346 = vadd.f32 %v894, %v1282
        %v1347 = vadd.f32 %v895, %v1283
        %v1348 = vadd.f32 %v896, %v1284
        %v1349 = vadd.f32 %v897, %v1285
        %v1350 = vadd.f32 %v898, %v1286
        %v1351 = vadd.f32 %v899, %v1287
        %v1352 = vadd.f32 %v900, %v1288
        %v1353 = vadd.f32 %v901, %v1289
        %v1354 = vadd.f32 %v902, %v1290
        %v1355 = vadd.f32 %v903, %v1291
        %v1356 = vadd.f32 %v904, %v1292
        %v1357 = vadd.f32 %v905, %v1293
        %v1358 = vadd.f32 %v906, %v1294
        %v1359 = vadd.f32 %v907, %v1295
        %v1360 = vadd.f32 %v908, %v1296
        %v1361 = vadd.f32 %v909, %v1297
        %v1362 = vadd.f32 %v910, %v1298
        %v1363 = vadd.f32 %v911, %v1299
        %v1364 = vadd.f32 %v912, %v1300
        %v1365 = vadd.f32 %v913, %v1301
        %v1366 = vadd.f32 %v914, %v1302
        %v1367 = vadd.f32 %v915, %v1303
        %v1368 = vadd.f32 %v916, %v1304
        %v1369 = vadd.f32 %v917, %v1305
        %v1370 = vadd.f32 %v918, %v1306
        %v1371 = vadd.f32 %v919, %v1307
        %v1372 = vadd.f32 %v920, %v1308
        %v1373 = vadd.f32 %v921, %v1309
        %v1374 = vadd.f32 %v922, %v1310
        %v1375 = vadd.f32 %v923, %v1311
        %v1376 = vadd.f32 %v924, %v1312
        %v1377 = vadd.f32 %v925, %v1313
        %v1378 = vadd.f32 %v926, %v1314
        %v1379 = vadd.f32 %v927, %v1315
        %v1380 = vadd.f32 %v928, %v1316
        %v1381 = vadd.f32 %v929, %v1317
        %v1382 = vadd.f32 %v930, %v1318
        %v1383 = vadd.f32 %v931, %v1319
        %v1384 = vadd.f32 %v932, %v1320
        %v1385 = vadd.f32 %v933, %v1321
        %v1386 = vadd.f32 %v934, %v1322
        %v1387 = vadd.f32 %v935, %v1323
        %v1388 = vadd.f32 %v936, %v1324
        %v1389 = vadd.f32 %v937, %v1325
        %v1390 = vadd.f32 %v938, %v1326
        %v1391 = vadd.f32 %v939, %v1327
        %v1392 = vadd.f32 %v940, %v1328
        %v1393 = vadd.f32 %v941, %v1329
        %v1394 = vadd.f32 %v942, %v1330
        %v1395 = vadd.f32 %v943, %v1331
        %v1396 = vadd.f32 %v944, %v1332
        %v1397 = vadd.f32 %v945, %v1333
        %v1398 = vadd.f32 %v946, %v1334
        %v1399 = vadd.f32 %v947, %v1335
        %v1400 = vadd.f32 %v948, %v1336
        %v1401 = vadd.f32 %v949, %v1337
        %v1402 = vadd.f32 %v950, %v1338
        %v1403 = vadd.f32 %v951, %v1339
        %v1404 = vadd.f32 %v952, %v1340
        %v1405 = vadd.f32 %v953, %v1341
        %1407 = vset.pattern.permute.xlu0 0
        %1408 = vperm.xlu0 %1407, %v496
        %v1409 = vpop.permute.xlu0 %1408
        %1412 = vset.pattern.permute.xlu0 0
        %1413 = vperm.xlu0 %1412, %v497
        %v1414 = vpop.permute.xlu0 %1413
        %1417 = vset.pattern.permute.xlu0 0
        %1418 = vperm.xlu0 %1417, %v498
        %v1419 = vpop.permute.xlu0 %1418
        %1422 = vset.pattern.permute.xlu0 0
        %1423 = vperm.xlu0 %1422, %v499
        %v1424 = vpop.permute.xlu0 %1423
        %1427 = vset.pattern.permute.xlu0 0
        %1428 = vperm.xlu0 %1427, %v500
        %v1429 = vpop.permute.xlu0 %1428
        %1432 = vset.pattern.permute.xlu0 0
        %1433 = vperm.xlu0 %1432, %v501
        %v1434 = vpop.permute.xlu0 %1433
        %1437 = vset.pattern.permute.xlu0 0
        %1438 = vperm.xlu0 %1437, %v502
        %v1439 = vpop.permute.xlu0 %1438
        %1442 = vset.pattern.permute.xlu0 0
        %1443 = vperm.xlu0 %1442, %v503
        %v1444 = vpop.permute.xlu0 %1443
        %1447 = vset.pattern.permute.xlu0 0
        %1448 = vperm.xlu0 %1447, %v504
        %v1449 = vpop.permute.xlu0 %1448
        %1452 = vset.pattern.permute.xlu0 0
        %1453 = vperm.xlu0 %1452, %v505
        %v1454 = vpop.permute.xlu0 %1453
        %1457 = vset.pattern.permute.xlu0 0
        %1458 = vperm.xlu0 %1457, %v506
        %v1459 = vpop.permute.xlu0 %1458
        %1462 = vset.pattern.permute.xlu0 0
        %1463 = vperm.xlu0 %1462, %v507
        %v1464 = vpop.permute.xlu0 %1463
        %1467 = vset.pattern.permute.xlu0 0
        %1468 = vperm.xlu0 %1467, %v508
        %v1469 = vpop.permute.xlu0 %1468
        %1472 = vset.pattern.permute.xlu0 0
        %1473 = vperm.xlu0 %1472, %v509
        %v1474 = vpop.permute.xlu0 %1473
        %1477 = vset.pattern.permute.xlu0 0
        %1478 = vperm.xlu0 %1477, %v510
        %v1479 = vpop.permute.xlu0 %1478
        %1482 = vset.pattern.permute.xlu0 0
        %1483 = vperm.xlu0 %1482, %v511
        %v1484 = vpop.permute.xlu0 %1483
        %1487 = vset.pattern.permute.xlu0 0
        %1488 = vperm.xlu0 %1487, %v512
        %v1489 = vpop.permute.xlu0 %1488
        %1492 = vset.pattern.permute.xlu0 0
        %1493 = vperm.xlu0 %1492, %v513
        %v1494 = vpop.permute.xlu0 %1493
        %1497 = vset.pattern.permute.xlu0 0
        %1498 = vperm.xlu0 %1497, %v514
        %v1499 = vpop.permute.xlu0 %1498
        %1502 = vset.pattern.permute.xlu0 0
        %1503 = vperm.xlu0 %1502, %v515
        %v1504 = vpop.permute.xlu0 %1503
        %1507 = vset.pattern.permute.xlu0 0
        %1508 = vperm.xlu0 %1507, %v516
        %v1509 = vpop.permute.xlu0 %1508
        %1512 = vset.pattern.permute.xlu0 0
        %1513 = vperm.xlu0 %1512, %v517
        %v1514 = vpop.permute.xlu0 %1513
        %1517 = vset.pattern.permute.xlu0 0
        %1518 = vperm.xlu0 %1517, %v518
        %v1519 = vpop.permute.xlu0 %1518
        %1522 = vset.pattern.permute.xlu0 0
        %1523 = vperm.xlu0 %1522, %v519
        %v1524 = vpop.permute.xlu0 %1523
        %1527 = vset.pattern.permute.xlu0 0
        %1528 = vperm.xlu0 %1527, %v520
        %v1529 = vpop.permute.xlu0 %1528
        %1532 = vset.pattern.permute.xlu0 0
        %1533 = vperm.xlu0 %1532, %v521
        %v1534 = vpop.permute.xlu0 %1533
        %1537 = vset.pattern.permute.xlu0 0
        %1538 = vperm.xlu0 %1537, %v522
        %v1539 = vpop.permute.xlu0 %1538
        %1542 = vset.pattern.permute.xlu0 0
        %1543 = vperm.xlu0 %1542, %v523
        %v1544 = vpop.permute.xlu0 %1543
        %1547 = vset.pattern.permute.xlu0 0
        %1548 = vperm.xlu0 %1547, %v524
        %v1549 = vpop.permute.xlu0 %1548
        %1552 = vset.pattern.permute.xlu0 0
        %1553 = vperm.xlu0 %1552, %v525
        %v1554 = vpop.permute.xlu0 %1553
        %1557 = vset.pattern.permute.xlu0 0
        %1558 = vperm.xlu0 %1557, %v526
        %v1559 = vpop.permute.xlu0 %1558
        %1562 = vset.pattern.permute.xlu0 0
        %1563 = vperm.xlu0 %1562, %v527
        %v1564 = vpop.permute.xlu0 %1563
        %1567 = vset.pattern.permute.xlu0 0
        %1568 = vperm.xlu0 %1567, %v528
        %v1569 = vpop.permute.xlu0 %1568
        %1572 = vset.pattern.permute.xlu0 0
        %1573 = vperm.xlu0 %1572, %v529
        %v1574 = vpop.permute.xlu0 %1573
        %1577 = vset.pattern.permute.xlu0 0
        %1578 = vperm.xlu0 %1577, %v530
        %v1579 = vpop.permute.xlu0 %1578
        %1582 = vset.pattern.permute.xlu0 0
        %1583 = vperm.xlu0 %1582, %v531
        %v1584 = vpop.permute.xlu0 %1583
        %1587 = vset.pattern.permute.xlu0 0
        %1588 = vperm.xlu0 %1587, %v532
        %v1589 = vpop.permute.xlu0 %1588
        %1592 = vset.pattern.permute.xlu0 0
        %1593 = vperm.xlu0 %1592, %v533
        %v1594 = vpop.permute.xlu0 %1593
        %1597 = vset.pattern.permute.xlu0 0
        %1598 = vperm.xlu0 %1597, %v534
        %v1599 = vpop.permute.xlu0 %1598
        %1602 = vset.pattern.permute.xlu0 0
        %1603 = vperm.xlu0 %1602, %v535
        %v1604 = vpop.permute.xlu0 %1603
        %1607 = vset.pattern.permute.xlu0 0
        %1608 = vperm.xlu0 %1607, %v536
        %v1609 = vpop.permute.xlu0 %1608
        %1612 = vset.pattern.permute.xlu0 0
        %1613 = vperm.xlu0 %1612, %v537
        %v1614 = vpop.permute.xlu0 %1613
        %1617 = vset.pattern.permute.xlu0 0
        %1618 = vperm.xlu0 %1617, %v538
        %v1619 = vpop.permute.xlu0 %1618
        %1622 = vset.pattern.permute.xlu0 0
        %1623 = vperm.xlu0 %1622, %v539
        %v1624 = vpop.permute.xlu0 %1623
        %1627 = vset.pattern.permute.xlu0 0
        %1628 = vperm.xlu0 %1627, %v540
        %v1629 = vpop.permute.xlu0 %1628
        %1632 = vset.pattern.permute.xlu0 0
        %1633 = vperm.xlu0 %1632, %v541
        %v1634 = vpop.permute.xlu0 %1633
        %1637 = vset.pattern.permute.xlu0 0
        %1638 = vperm.xlu0 %1637, %v542
        %v1639 = vpop.permute.xlu0 %1638
        %1642 = vset.pattern.permute.xlu0 0
        %1643 = vperm.xlu0 %1642, %v543
        %v1644 = vpop.permute.xlu0 %1643
        %1647 = vset.pattern.permute.xlu0 0
        %1648 = vperm.xlu0 %1647, %v544
        %v1649 = vpop.permute.xlu0 %1648
        %1652 = vset.pattern.permute.xlu0 0
        %1653 = vperm.xlu0 %1652, %v545
        %v1654 = vpop.permute.xlu0 %1653
        %1657 = vset.pattern.permute.xlu0 0
        %1658 = vperm.xlu0 %1657, %v546
        %v1659 = vpop.permute.xlu0 %1658
        %1662 = vset.pattern.permute.xlu0 0
        %1663 = vperm.xlu0 %1662, %v547
        %v1664 = vpop.permute.xlu0 %1663
        %1667 = vset.pattern.permute.xlu0 0
        %1668 = vperm.xlu0 %1667, %v548
        %v1669 = vpop.permute.xlu0 %1668
        %1672 = vset.pattern.permute.xlu0 0
        %1673 = vperm.xlu0 %1672, %v549
        %v1674 = vpop.permute.xlu0 %1673
        %1677 = vset.pattern.permute.xlu0 0
        %1678 = vperm.xlu0 %1677, %v550
        %v1679 = vpop.permute.xlu0 %1678
        %1682 = vset.pattern.permute.xlu0 0
        %1683 = vperm.xlu0 %1682, %v551
        %v1684 = vpop.permute.xlu0 %1683
        %1687 = vset.pattern.permute.xlu0 0
        %1688 = vperm.xlu0 %1687, %v552
        %v1689 = vpop.permute.xlu0 %1688
        %1692 = vset.pattern.permute.xlu0 0
        %1693 = vperm.xlu0 %1692, %v553
        %v1694 = vpop.permute.xlu0 %1693
        %1697 = vset.pattern.permute.xlu0 0
        %1698 = vperm.xlu0 %1697, %v554
        %v1699 = vpop.permute.xlu0 %1698
        %1702 = vset.pattern.permute.xlu0 0
        %1703 = vperm.xlu0 %1702, %v555
        %v1704 = vpop.permute.xlu0 %1703
        %1707 = vset.pattern.permute.xlu0 0
        %1708 = vperm.xlu0 %1707, %v556
        %v1709 = vpop.permute.xlu0 %1708
        %1712 = vset.pattern.permute.xlu0 0
        %1713 = vperm.xlu0 %1712, %v557
        %v1714 = vpop.permute.xlu0 %1713
        %1717 = vset.pattern.permute.xlu0 0
        %1718 = vperm.xlu0 %1717, %v558
        %v1719 = vpop.permute.xlu0 %1718
        %1722 = vset.pattern.permute.xlu0 0
        %1723 = vperm.xlu0 %1722, %v559
        %v1724 = vpop.permute.xlu0 %1723
        %v1726 = vadd.f32 %v1342, %v1409
        %v1727 = vadd.f32 %v1343, %v1414
        %v1728 = vadd.f32 %v1344, %v1419
        %v1729 = vadd.f32 %v1345, %v1424
        %v1730 = vadd.f32 %v1346, %v1429
        %v1731 = vadd.f32 %v1347, %v1434
        %v1732 = vadd.f32 %v1348, %v1439
        %v1733 = vadd.f32 %v1349, %v1444
        %v1734 = vadd.f32 %v1350, %v1449
        %v1735 = vadd.f32 %v1351, %v1454
        %v1736 = vadd.f32 %v1352, %v1459
        %v1737 = vadd.f32 %v1353, %v1464
        %v1738 = vadd.f32 %v1354, %v1469
        %v1739 = vadd.f32 %v1355, %v1474
        %v1740 = vadd.f32 %v1356, %v1479
        %v1741 = vadd.f32 %v1357, %v1484
        %v1742 = vadd.f32 %v1358, %v1489
        %v1743 = vadd.f32 %v1359, %v1494
        %v1744 = vadd.f32 %v1360, %v1499
        %v1745 = vadd.f32 %v1361, %v1504
        %v1746 = vadd.f32 %v1362, %v1509
        %v1747 = vadd.f32 %v1363, %v1514
        %v1748 = vadd.f32 %v1364, %v1519
        %v1749 = vadd.f32 %v1365, %v1524
        %v1750 = vadd.f32 %v1366, %v1529
        %v1751 = vadd.f32 %v1367, %v1534
        %v1752 = vadd.f32 %v1368, %v1539
        %v1753 = vadd.f32 %v1369, %v1544
        %v1754 = vadd.f32 %v1370, %v1549
        %v1755 = vadd.f32 %v1371, %v1554
        %v1756 = vadd.f32 %v1372, %v1559
        %v1757 = vadd.f32 %v1373, %v1564
        %v1758 = vadd.f32 %v1374, %v1569
        %v1759 = vadd.f32 %v1375, %v1574
        %v1760 = vadd.f32 %v1376, %v1579
        %v1761 = vadd.f32 %v1377, %v1584
        %v1762 = vadd.f32 %v1378, %v1589
        %v1763 = vadd.f32 %v1379, %v1594
        %v1764 = vadd.f32 %v1380, %v1599
        %v1765 = vadd.f32 %v1381, %v1604
        %v1766 = vadd.f32 %v1382, %v1609
        %v1767 = vadd.f32 %v1383, %v1614
        %v1768 = vadd.f32 %v1384, %v1619
        %v1769 = vadd.f32 %v1385, %v1624
        %v1770 = vadd.f32 %v1386, %v1629
        %v1771 = vadd.f32 %v1387, %v1634
        %v1772 = vadd.f32 %v1388, %v1639
        %v1773 = vadd.f32 %v1389, %v1644
        %v1774 = vadd.f32 %v1390, %v1649
        %v1775 = vadd.f32 %v1391, %v1654
        %v1776 = vadd.f32 %v1392, %v1659
        %v1777 = vadd.f32 %v1393, %v1664
        %v1778 = vadd.f32 %v1394, %v1669
        %v1779 = vadd.f32 %v1395, %v1674
        %v1780 = vadd.f32 %v1396, %v1679
        %v1781 = vadd.f32 %v1397, %v1684
        %v1782 = vadd.f32 %v1398, %v1689
        %v1783 = vadd.f32 %v1399, %v1694
        %v1784 = vadd.f32 %v1400, %v1699
        %v1785 = vadd.f32 %v1401, %v1704
        %v1786 = vadd.f32 %v1402, %v1709
        %v1787 = vadd.f32 %v1403, %v1714
        %v1788 = vadd.f32 %v1404, %v1719
        %v1789 = vadd.f32 %v1405, %v1724
        %v1790 = vand.u32 2147483647, %v1726
        %v1791 = vand.u32 2147483647, %v1727
        %v1792 = vand.u32 2147483647, %v1728
        %v1793 = vand.u32 2147483647, %v1729
        %v1794 = vand.u32 2147483647, %v1730
        %v1795 = vand.u32 2147483647, %v1731
        %v1796 = vand.u32 2147483647, %v1732
        %v1797 = vand.u32 2147483647, %v1733
        %v1798 = vand.u32 2147483647, %v1734
        %v1799 = vand.u32 2147483647, %v1735
        %v1800 = vand.u32 2147483647, %v1736
        %v1801 = vand.u32 2147483647, %v1737
        %v1802 = vand.u32 2147483647, %v1738
        %v1803 = vand.u32 2147483647, %v1739
        %v1804 = vand.u32 2147483647, %v1740
        %v1805 = vand.u32 2147483647, %v1741
        %v1806 = vand.u32 2147483647, %v1742
        %v1807 = vand.u32 2147483647, %v1743
        %v1808 = vand.u32 2147483647, %v1744
        %v1809 = vand.u32 2147483647, %v1745
        %v1810 = vand.u32 2147483647, %v1746
        %v1811 = vand.u32 2147483647, %v1747
        %v1812 = vand.u32 2147483647, %v1748
        %v1813 = vand.u32 2147483647, %v1749
        %v1814 = vand.u32 2147483647, %v1750
        %v1815 = vand.u32 2147483647, %v1751
        %v1816 = vand.u32 2147483647, %v1752
        %v1817 = vand.u32 2147483647, %v1753
        %v1818 = vand.u32 2147483647, %v1754
        %v1819 = vand.u32 2147483647, %v1755
        %v1820 = vand.u32 2147483647, %v1756
        %v1821 = vand.u32 2147483647, %v1757
        %v1822 = vand.u32 2147483647, %v1758
        %v1823 = vand.u32 2147483647, %v1759
        %v1824 = vand.u32 2147483647, %v1760
        %v1825 = vand.u32 2147483647, %v1761
        %v1826 = vand.u32 2147483647, %v1762
        %v1827 = vand.u32 2147483647, %v1763
        %v1828 = vand.u32 2147483647, %v1764
        %v1829 = vand.u32 2147483647, %v1765
        %v1830 = vand.u32 2147483647, %v1766
        %v1831 = vand.u32 2147483647, %v1767
        %v1832 = vand.u32 2147483647, %v1768
        %v1833 = vand.u32 2147483647, %v1769
        %v1834 = vand.u32 2147483647, %v1770
        %v1835 = vand.u32 2147483647, %v1771
        %v1836 = vand.u32 2147483647, %v1772
        %v1837 = vand.u32 2147483647, %v1773
        %v1838 = vand.u32 2147483647, %v1774
        %v1839 = vand.u32 2147483647, %v1775
        %v1840 = vand.u32 2147483647, %v1776
        %v1841 = vand.u32 2147483647, %v1777
        %v1842 = vand.u32 2147483647, %v1778
        %v1843 = vand.u32 2147483647, %v1779
        %v1844 = vand.u32 2147483647, %v1780
        %v1845 = vand.u32 2147483647, %v1781
        %v1846 = vand.u32 2147483647, %v1782
        %v1847 = vand.u32 2147483647, %v1783
        %v1848 = vand.u32 2147483647, %v1784
        %v1849 = vand.u32 2147483647, %v1785
        %v1850 = vand.u32 2147483647, %v1786
        %v1851 = vand.u32 2147483647, %v1787
        %v1852 = vand.u32 2147483647, %v1788
        %v1853 = vand.u32 2147483647, %v1789
        %v1854 = vsub.f32 1.0, %v1790
        %v1855 = vsub.f32 1.0, %v1791
        %v1856 = vsub.f32 1.0, %v1792
        %v1857 = vsub.f32 1.0, %v1793
        %v1858 = vsub.f32 1.0, %v1794
        %v1859 = vsub.f32 1.0, %v1795
        %v1860 = vsub.f32 1.0, %v1796
        %v1861 = vsub.f32 1.0, %v1797
        %v1862 = vsub.f32 1.0, %v1798
        %v1863 = vsub.f32 1.0, %v1799
        %v1864 = vsub.f32 1.0, %v1800
        %v1865 = vsub.f32 1.0, %v1801
        %v1866 = vsub.f32 1.0, %v1802
        %v1867 = vsub.f32 1.0, %v1803
        %v1868 = vsub.f32 1.0, %v1804
        %v1869 = vsub.f32 1.0, %v1805
        %v1870 = vsub.f32 1.0, %v1806
        %v1871 = vsub.f32 1.0, %v1807
        %v1872 = vsub.f32 1.0, %v1808
        %v1873 = vsub.f32 1.0, %v1809
        %v1874 = vsub.f32 1.0, %v1810
        %v1875 = vsub.f32 1.0, %v1811
        %v1876 = vsub.f32 1.0, %v1812
        %v1877 = vsub.f32 1.0, %v1813
        %v1878 = vsub.f32 1.0, %v1814
        %v1879 = vsub.f32 1.0, %v1815
        %v1880 = vsub.f32 1.0, %v1816
        %v1881 = vsub.f32 1.0, %v1817
        %v1882 = vsub.f32 1.0, %v1818
        %v1883 = vsub.f32 1.0, %v1819
        %v1884 = vsub.f32 1.0, %v1820
        %v1885 = vsub.f32 1.0, %v1821
        %v1886 = vsub.f32 1.0, %v1822
        %v1887 = vsub.f32 1.0, %v1823
        %v1888 = vsub.f32 1.0, %v1824
        %v1889 = vsub.f32 1.0, %v1825
        %v1890 = vsub.f32 1.0, %v1826
        %v1891 = vsub.f32 1.0, %v1827
        %v1892 = vsub.f32 1.0, %v1828
        %v1893 = vsub.f32 1.0, %v1829
        %v1894 = vsub.f32 1.0, %v1830
        %v1895 = vsub.f32 1.0, %v1831
        %v1896 = vsub.f32 1.0, %v1832
        %v1897 = vsub.f32 1.0, %v1833
        %v1898 = vsub.f32 1.0, %v1834
        %v1899 = vsub.f32 1.0, %v1835
        %v1900 = vsub.f32 1.0, %v1836
        %v1901 = vsub.f32 1.0, %v1837
        %v1902 = vsub.f32 1.0, %v1838
        %v1903 = vsub.f32 1.0, %v1839
        %v1904 = vsub.f32 1.0, %v1840
        %v1905 = vsub.f32 1.0, %v1841
        %v1906 = vsub.f32 1.0, %v1842
        %v1907 = vsub.f32 1.0, %v1843
        %v1908 = vsub.f32 1.0, %v1844
        %v1909 = vsub.f32 1.0, %v1845
        %v1910 = vsub.f32 1.0, %v1846
        %v1911 = vsub.f32 1.0, %v1847
        %v1912 = vsub.f32 1.0, %v1848
        %v1913 = vsub.f32 1.0, %v1849
        %v1914 = vsub.f32 1.0, %v1850
        %v1915 = vsub.f32 1.0, %v1851
        %v1916 = vsub.f32 1.0, %v1852
        %v1917 = vsub.f32 1.0, %v1853
        %v1918 = vmax.f32 %v1854, 0.0
        %v1919 = vmax.f32 %v1855, 0.0
        %v1920 = vmax.f32 %v1856, 0.0
        %v1921 = vmax.f32 %v1857, 0.0
        %v1922 = vmax.f32 %v1858, 0.0
        %v1923 = vmax.f32 %v1859, 0.0
        %v1924 = vmax.f32 %v1860, 0.0
        %v1925 = vmax.f32 %v1861, 0.0
        %v1926 = vmax.f32 %v1862, 0.0
        %v1927 = vmax.f32 %v1863, 0.0
        %v1928 = vmax.f32 %v1864, 0.0
        %v1929 = vmax.f32 %v1865, 0.0
        %v1930 = vmax.f32 %v1866, 0.0
        %v1931 = vmax.f32 %v1867, 0.0
        %v1932 = vmax.f32 %v1868, 0.0
        %v1933 = vmax.f32 %v1869, 0.0
        %v1934 = vmax.f32 %v1870, 0.0
        %v1935 = vmax.f32 %v1871, 0.0
        %v1936 = vmax.f32 %v1872, 0.0
        %v1937 = vmax.f32 %v1873, 0.0
        %v1938 = vmax.f32 %v1874, 0.0
        %v1939 = vmax.f32 %v1875, 0.0
        %v1940 = vmax.f32 %v1876, 0.0
        %v1941 = vmax.f32 %v1877, 0.0
        %v1942 = vmax.f32 %v1878, 0.0
        %v1943 = vmax.f32 %v1879, 0.0
        %v1944 = vmax.f32 %v1880, 0.0
        %v1945 = vmax.f32 %v1881, 0.0
        %v1946 = vmax.f32 %v1882, 0.0
        %v1947 = vmax.f32 %v1883, 0.0
        %v1948 = vmax.f32 %v1884, 0.0
        %v1949 = vmax.f32 %v1885, 0.0
        %v1950 = vmax.f32 %v1886, 0.0
        %v1951 = vmax.f32 %v1887, 0.0
        %v1952 = vmax.f32 %v1888, 0.0
        %v1953 = vmax.f32 %v1889, 0.0
        %v1954 = vmax.f32 %v1890, 0.0
        %v1955 = vmax.f32 %v1891, 0.0
        %v1956 = vmax.f32 %v1892, 0.0
        %v1957 = vmax.f32 %v1893, 0.0
        %v1958 = vmax.f32 %v1894, 0.0
        %v1959 = vmax.f32 %v1895, 0.0
        %v1960 = vmax.f32 %v1896, 0.0
        %v1961 = vmax.f32 %v1897, 0.0
        %v1962 = vmax.f32 %v1898, 0.0
        %v1963 = vmax.f32 %v1899, 0.0
        %v1964 = vmax.f32 %v1900, 0.0
        %v1965 = vmax.f32 %v1901, 0.0
        %v1966 = vmax.f32 %v1902, 0.0
        %v1967 = vmax.f32 %v1903, 0.0
        %v1968 = vmax.f32 %v1904, 0.0
        %v1969 = vmax.f32 %v1905, 0.0
        %v1970 = vmax.f32 %v1906, 0.0
        %v1971 = vmax.f32 %v1907, 0.0
        %v1972 = vmax.f32 %v1908, 0.0
        %v1973 = vmax.f32 %v1909, 0.0
        %v1974 = vmax.f32 %v1910, 0.0
        %v1975 = vmax.f32 %v1911, 0.0
        %v1976 = vmax.f32 %v1912, 0.0
        %v1977 = vmax.f32 %v1913, 0.0
        %v1978 = vmax.f32 %v1914, 0.0
        %v1979 = vmax.f32 %v1915, 0.0
        %v1980 = vmax.f32 %v1916, 0.0
        %v1981 = vmax.f32 %v1917, 0.0
        %v1982 = vld [vmem:[%s335] sm:$0xff]
        %v1983 = vld [vmem:[%s335 + $0x8] sm:$0xff]
        %v1984 = vpack.c.bf16 %v1919, %v1918
        %v1985 = vpack.c.bf16 %v1921, %v1920
        %v1986 = vpack.c.bf16 %v1923, %v1922
        %v1987 = vpack.c.bf16 %v1925, %v1924
        %v1988 = vpack.c.bf16 %v1927, %v1926
        %v1989 = vpack.c.bf16 %v1929, %v1928
        %v1990 = vpack.c.bf16 %v1931, %v1930
        %v1991 = vpack.c.bf16 %v1933, %v1932
        %v1992 = vpack.c.bf16 %v1935, %v1934
        %v1993 = vpack.c.bf16 %v1937, %v1936
        %v1994 = vpack.c.bf16 %v1939, %v1938
        %v1995 = vpack.c.bf16 %v1941, %v1940
        %v1996 = vpack.c.bf16 %v1943, %v1942
        %v1997 = vpack.c.bf16 %v1945, %v1944
        %v1998 = vpack.c.bf16 %v1947, %v1946
        %v1999 = vpack.c.bf16 %v1949, %v1948
        %v2000 = vpack.c.bf16 %v1951, %v1950
        %v2001 = vpack.c.bf16 %v1953, %v1952
        %v2002 = vpack.c.bf16 %v1955, %v1954
        %v2003 = vpack.c.bf16 %v1957, %v1956
        %v2004 = vpack.c.bf16 %v1959, %v1958
        %v2005 = vpack.c.bf16 %v1961, %v1960
        %v2006 = vpack.c.bf16 %v1963, %v1962
        %v2007 = vpack.c.bf16 %v1965, %v1964
        %v2008 = vpack.c.bf16 %v1967, %v1966
        %v2009 = vpack.c.bf16 %v1969, %v1968
        %v2010 = vpack.c.bf16 %v1971, %v1970
        %v2011 = vpack.c.bf16 %v1973, %v1972
        %v2012 = vpack.c.bf16 %v1975, %v1974
        %v2013 = vpack.c.bf16 %v1977, %v1976
        %v2014 = vpack.c.bf16 %v1979, %v1978
        %v2015 = vpack.c.bf16 %v1981, %v1980
        %v2020 = vunpack.c.l.b16 %v560
        %v2021 = vunpack.c.h.b16 %v560
        %v2022 = vunpack.c.l.b16 %v561
        %v2023 = vunpack.c.h.b16 %v561
        %v2024 = vunpack.c.l.b16 %v562
        %v2025 = vunpack.c.h.b16 %v562
        %v2026 = vunpack.c.l.b16 %v563
        %v2027 = vunpack.c.h.b16 %v563
        %v2028 = vpack.c.b16 %v2024, %v2020
        %v2029 = vpack.c.b16 %v2025, %v2021
        %v2030 = vpack.c.b16 %v2026, %v2022
        %v2031 = vpack.c.b16 %v2027, %v2023
        %2036 = vmatprep.subr.bf16.mxu0 0
        %2037 = vmatpush1.bf16.msra.mxu0 %v1984
        %2038 = vmatprep.subr.bf16.mxu0 0
        %2039 = vmatpush1.bf16.msra.mxu0 %v1985
        %2040 = vmatprep.subr.bf16.mxu0 0
        %2041 = vmatpush1.bf16.msra.mxu0 %v1986
        %2042 = vmatprep.subr.bf16.mxu0 0
        %2043 = vmatpush1.bf16.msra.mxu0 %v1987
        %2044 = vmatprep.subr.bf16.mxu0 0
        %2045 = vmatpush1.bf16.msra.mxu0 %v1988
        %2046 = vmatprep.subr.bf16.mxu0 0
        %2047 = vmatpush1.bf16.msra.mxu0 %v1989
        %2048 = vmatprep.subr.bf16.mxu0 0
        %2049 = vmatpush1.bf16.msra.mxu0 %v1990
        %2050 = vmatprep.subr.bf16.mxu0 0
        %2051 = vmatpush1.bf16.msra.mxu0 %v1991
        %2052 = vmatprep.subr.bf16.mxu0 0
        %2053 = vmatpush1.bf16.msra.mxu0 %v1992
        %2054 = vmatprep.subr.bf16.mxu0 0
        %2055 = vmatpush1.bf16.msra.mxu0 %v1993
        %2056 = vmatprep.subr.bf16.mxu0 0
        %2057 = vmatpush1.bf16.msra.mxu0 %v1994
        %2058 = vmatprep.subr.bf16.mxu0 0
        %2059 = vmatpush1.bf16.msra.mxu0 %v1995
        %2060 = vmatprep.subr.bf16.mxu0 0
        %2061 = vmatpush1.bf16.msra.mxu0 %v1996
        %2062 = vmatprep.subr.bf16.mxu0 0
        %2063 = vmatpush1.bf16.msra.mxu0 %v1997
        %2064 = vmatprep.subr.bf16.mxu0 0
        %2065 = vmatpush1.bf16.msra.mxu0 %v1998
        %2066 = vmatprep.subr.bf16.mxu0 0
        %2067 = vmatpush1.bf16.msra.mxu0 %v1999
        %2068 = vmatprep.mubr.bf16.mxu0 %v2029
        %2069 = vmatmul.mubr.bf16.gmra.mrb[0].mxu0 %v2028
        %v2070 = vpop.f32.mrb[0].mxu0
        %v2071 = vadd.f32 0.0, %v2070
        %v2072 = vpop.f32.mrb[0].mxu0
        %v2073 = vpop.f32.mrb[0].mxu0
        %v2074 = vadd.f32 0.0, %v2073
        %v2075 = vpop.f32.mrb[0].mxu0
        %2076 = vdwg.mxu0
        %2077 = vmatprep.subr.bf16.mxu0 0
        %2078 = vmatpush1.bf16.msra.mxu0 %v2000
        %2079 = vmatprep.subr.bf16.mxu0 0
        %2080 = vmatpush1.bf16.msra.mxu0 %v2001
        %2081 = vmatprep.subr.bf16.mxu0 0
        %2082 = vmatpush1.bf16.msra.mxu0 %v2002
        %2083 = vmatprep.subr.bf16.mxu0 0
        %2084 = vmatpush1.bf16.msra.mxu0 %v2003
        %2085 = vmatprep.subr.bf16.mxu0 0
        %2086 = vmatpush1.bf16.msra.mxu0 %v2004
        %2087 = vmatprep.subr.bf16.mxu0 0
        %2088 = vmatpush1.bf16.msra.mxu0 %v2005
        %2089 = vmatprep.subr.bf16.mxu0 0
        %2090 = vmatpush1.bf16.msra.mxu0 %v2006
        %2091 = vmatprep.subr.bf16.mxu0 0
        %2092 = vmatpush1.bf16.msra.mxu0 %v2007
        %2093 = vmatprep.subr.bf16.mxu0 0
        %2094 = vmatpush1.bf16.msra.mxu0 %v2008
        %2095 = vmatprep.subr.bf16.mxu0 0
        %2096 = vmatpush1.bf16.msra.mxu0 %v2009
        %2097 = vmatprep.subr.bf16.mxu0 0
        %2098 = vmatpush1.bf16.msra.mxu0 %v2010
        %2099 = vmatprep.subr.bf16.mxu0 0
        %2100 = vmatpush1.bf16.msra.mxu0 %v2011
        %2101 = vmatprep.subr.bf16.mxu0 0
        %2102 = vmatpush1.bf16.msra.mxu0 %v2012
        %2103 = vmatprep.subr.bf16.mxu0 0
        %2104 = vmatpush1.bf16.msra.mxu0 %v2013
        %2105 = vmatprep.subr.bf16.mxu0 0
        %2106 = vmatpush1.bf16.msra.mxu0 %v2014
        %2107 = vmatprep.subr.bf16.mxu0 0
        %2108 = vmatpush1.bf16.msra.mxu0 %v2015
        %2109 = vmatprep.mubr.bf16.mxu0 %v2031
        %2110 = vmatmul.mubr.bf16.gmra.mrb[0].mxu0 %v2030
        %v2111 = vpop.f32.mrb[0].mxu0
        %v2112 = vadd.f32 %v2071, %v2111
        %v2113 = vpop.f32.mrb[0].mxu0
        %v2114 = vpop.f32.mrb[0].mxu0
        %v2115 = vadd.f32 %v2074, %v2114
        %v2116 = vpop.f32.mrb[0].mxu0
        %2117 = vdwg.mxu0
        %v2118 = vadd.f32 %v1982, %v2112
        %v2119 = vadd.f32 %v1983, %v2115
        %2120 = vst [vmem:[%s335] sm:$0xff] %v2118
        %2121 = vst [vmem:[%s335 + $0x8] sm:$0xff] %v2119
        %p2122 = scmp.eq.s32.totalorder %s26, 5
        // Predicated region
        $region68: #{tpu_custom_call.1} parent=58 // pred_check
          %p2123 = pneg %p2122
        $region69: #{tpu_custom_call.1} parent=58 // pred_check_branch
          %2125 = sbr.rel (%p2123) target = $region71
        $region70: #{tpu_custom_call.1} parent=58 // pred_region
          %v2126 = vld [vmem:[%s339] sm:$0x1]
          %v2127 = vld [vmem:[%s339 + $0x1] sm:$0x1]
          %v2128 = vmul.f32 %v2126, %v2126
          %v2129 = vmul.f32 %v2127, %v2127
          %v2130 = vadd.f32 %v2128, %v2129
          %vm2131 = vcmp.le.f32.partialorder %v2130, 1.0
          %v2132 = vld [vmem:[%s335] sm:$0xff]
          %v2133 = vld [vmem:[%s335 + $0x8] sm:$0xff]
          %v2134 = vmul.f32 %v2132, 0.008726646
          %v2135 = vmul.f32 %v2133, 0.008726646
          %v2136 = vsel %vm2131, 1, 0
          %v2137 = vlaneseq
          %v2138 = vshrl.u32 %v2137, 7
          %v2139 = vsub.s32 0, %v2138
          %v2140 = vrot.slane %v2136, %v2139
          %vm2141 = vcmp.eq.s32.totalorder %v2140, 1
          %v2142 = vsel %vm2141, %v2134, 0.0
          %v2143 = vsel %vm2141, %v2135, 0.0
          %2144 = vst [vmem:[%s335] sm:$0xff] %v2142
          %2145 = vst [vmem:[%s335 + $0x8] sm:$0xff] %v2143
        $region71: #{tpu_custom_call.1} parent=58 // pred_fallthru
          _
        %s2146 = sand.u32 %s180, 1
        %s2147 = scalar_lea.sflag [#allocation4], %s2146
        %s2148 = sand.u32 %s180, 1
        %s2149 = smul.addr %s2148, 16
        %s2150 = scalar_lea.vmem [#allocation3], %s2149
        // Predicated region
        $region72: #{tpu_custom_call.1} parent=58 // pred_check
          %p2151 = pneg %p190
        $region73: #{tpu_custom_call.1} parent=58 // pred_check_branch
          %2153 = sbr.rel (%p2151) target = $region75
        $region74: #{tpu_custom_call.1} parent=58 // pred_region
          %s2154 = smul.u32 2, %s24
          %s2156 = ssub.s32 256, 256
          %2157 = vsyncadd %s2147, %s2156
          %s2158 = smul.addr %s2154, 2
          %s2159 = sadd.s32 %s25, %s2158
          %s2160 = smul.addr %s2159, 128
          %s2161 = scalar_lea.hbm %s5, %s2160
          %s2162 = sshll.u32 %s2150, 4
          %s2163 = int_to_ptr.vmem [resolvable:$true] %s2162
          %2168 = dma.vmem_to_hbm [thread:$0]  %s2163, 256, %s2161, %s2147, 128, 256, 8
        $region75: #{tpu_custom_call.1} parent=58 // pred_fallthru
          _
      $region59: #{tpu_custom_call.1} parent=5 // pred_fallthru
        _
      %p2169 = scmp.le.s32.totalorder 2, %s14
      // Predicated region
      $region76: #{tpu_custom_call.1} parent=5 // pred_check
        %p2170 = pneg %p2169
      $region77: #{tpu_custom_call.1} parent=5 // pred_check_branch
        %2172 = sbr.rel (%p2170) target = $region79
      $region78: #{tpu_custom_call.1} parent=5 // pred_region
        %s2173 = ssub.s32 %s14, 2
        // Predicated region
        $region80: #{tpu_custom_call.1} parent=78 // pred_check
          %p2174 = pneg %p196
        $region81: #{tpu_custom_call.1} parent=78 // pred_check_branch
          %2176 = sbr.rel (%p2174) target = $region83
        $region82: #{tpu_custom_call.1} parent=78 // pred_region
          %s2177 = sand.u32 %s181, 1
          %s2178 = scalar_lea.sflag [#allocation4], %s2177
          %s2179 = sand.u32 %s181, 1
          %s2180 = smul.addr %s2179, 16
          %s2181 = scalar_lea.vmem [#allocation3], %s2180
          %2182 = dma.done %s2178, 256
        $region83: #{tpu_custom_call.1} parent=78 // pred_fallthru
          _
      $region79: #{tpu_custom_call.1} parent=5 // pred_fallthru
        _
    $region6: #{tpu_custom_call.1} parent=1 // loop_footer
      %s18 = sadd.s32 1, %s14
    $region7: #{tpu_custom_call.1} parent=1 // loop_footer_branch
      %13 = sbr.rel target = $region3
    $region8: #{tpu_custom_call.1} parent=1 // loop_exit
      _
    %2183 = vsyncpa [#allocation4], 1
    %s2184 = scalar_lea.sflag [#allocation4], 1
    %2185 = vsyncpa %s2184, 1

</llo_original>
